<compile_context>
chip_gen: v7x
topology: tpu7x:2x2x1
jax: 0.10.0
libtpu: 0.0.40
codegen_flags: <defaults>
</compile_context>

<pallas_src>
import functools

import jax
import jax.numpy as jnp
from jax.experimental import pallas as pl
from jax.experimental.pallas import tpu as pltpu

EPS = 1e-5                      # PyTorch BatchNorm2d default eps
TM_TARGET = 1024                # target M tile (lanes), multiple of 128
VMEM_BUDGET = 24 * 1024 * 1024  # conservative block budget across v5e/v6e/v7x


def _round_up(x, m):
    return ((x + m - 1) // m) * m


def _round_down_128(x):
    return max(128, (x // 128) * 128)


# --------------------------------------------------------------------------
# Pallas kernels: fused (matmul + folded bias/BN [+ scaled skip] + activation)
#   x_ref    : (K, TM)    bf16   im2col columns (M on lanes)
#   w_ref    : (Cout, K)  bf16   BN-scale-folded weights (resident)
#   shift_ref: (Cout, 1)  f32    bias*scale + shift (folded, resident)
#   scale_ref: (Cout, 1)  f32    BN scale (skip variant only, resident)
#   skip_ref : (Cout, TM) bf16
#   o_ref    : (Cout, TM) bf16
# --------------------------------------------------------------------------
def _activate(y, act):
    if act == "relu":
        return jnp.maximum(y, 0.0)
    if act == "sigmoid":
        return 1.0 / (1.0 + jnp.exp(-y))      # exact recip: stays in [0, 1]
    return y


def _fused_kernel_noskip(x_ref, w_ref, shift_ref, o_ref, *, act):
    y = jnp.dot(w_ref[...], x_ref[...], preferred_element_type=jnp.float32)
    y = y + shift_ref[...]
    o_ref[...] = _activate(y, act).astype(o_ref.dtype)


def _fused_kernel_skip(x_ref, w_ref, shift_ref, scale_ref, skip_ref, o_ref, *,
                       act):
    y = jnp.dot(w_ref[...], x_ref[...], preferred_element_type=jnp.float32)
    y = y + shift_ref[...] + scale_ref[...] * skip_ref[...].astype(jnp.float32)
    o_ref[...] = _activate(y, act).astype(o_ref.dtype)


def fused_conv_matmul(col, wT, shift, scale, skip_cm, act):
    """col:(K,M) bf16, wT:(Cout,K) bf16, shift/scale:(Cout,1) f32,
    skip_cm:(Cout,M) bf16 or None  ->  (Cout, M) bf16."""
    K, M = col.shape
    cout = wT.shape[0]
    has_skip = skip_cm is not None

    # ---- per-layer tile selection against the VMEM budget ----
    # double-buffered bf16 x-block + bf16 out-block (+ bf16 skip-block)
    bytes_per_m = 2 * K * 2 + 2 * cout * 2 + (2 * cout * 2 if has_skip else 0)
    fixed_bytes = 2 * cout * K * 2 + 4 * cout * 4     # weights + shift/scale
    tm_cap = _round_down_128((VMEM_BUDGET - fixed_bytes) // bytes_per_m)

    mp128 = _round_up(M, 128)
    tm = min(TM_TARGET, mp128, tm_cap)
    # v7x: keep >= 2 grid steps on the parallel M axis so both TCs get work.
    if mp128 // tm < 2 and mp128 >= 256:
        tm = _round_down_128(mp128 // 2)
    mp = _round_up(M, tm)

    if mp != M:
        col = jnp.pad(col, ((0, 0), (0, mp - M)))
        if has_skip:
            skip_cm = jnp.pad(skip_cm, ((0, 0), (0, mp - M)))

    grid = (mp // tm,)
    x_spec = pl.BlockSpec((K, tm), lambda i: (0, i))
    w_spec = pl.BlockSpec((cout, K), lambda i: (0, 0))        # resident
    vec_spec = pl.BlockSpec((cout, 1), lambda i: (0, 0))      # resident
    mo_spec = pl.BlockSpec((cout, tm), lambda i: (0, i))

    if has_skip:
        kernel = functools.partial(_fused_kernel_skip, act=act)
        in_specs = [x_spec, w_spec, vec_spec, vec_spec, mo_spec]
        args = (col, wT, shift, scale, skip_cm)
    else:
        kernel = functools.partial(_fused_kernel_noskip, act=act)
        in_specs = [x_spec, w_spec, vec_spec]
        args = (col, wT, shift)

    # vmem limit computed from the actual blocks (+ slack), clamped for v7x.
    vmem_limit = fixed_bytes + tm * bytes_per_m + (2 << 20)
    vmem_limit = max(4 << 20, min(vmem_limit, 48 << 20))

    out = pl.pallas_call(
        kernel,
        out_shape=jax.ShapeDtypeStruct((cout, mp), jnp.bfloat16),
        grid=grid,
        in_specs=in_specs,
        out_specs=mo_spec,
        compiler_params=pltpu.CompilerParams(
            dimension_semantics=("parallel",),
            vmem_limit_bytes=vmem_limit),
    )(*args)
    return out[:, :M]


# --------------------------------------------------------------------------
# Glue: channel-major im2col, conv / conv-transpose blocks (trace-time JAX)
# --------------------------------------------------------------------------
def im2col_cm(x, kh, kw, stride, pad):
    """x: (C, N, H, W) channel-major -> ((kh*kw*C, N*Ho*Wo), Ho, Wo).

    K is ordered (tap=(dy,dx), cin) to match the (Cout, kh, kw, Cin) weight
    reshape; output is already (K, M) so no transpose is needed."""
    if pad > 0:
        x = jnp.pad(x, ((0, 0), (0, 0), (pad, pad), (pad, pad)))
    C, N, Hp, Wp = x.shape
    Ho = (Hp - kh) // stride + 1
    Wo = (Wp - kw) // stride + 1
    taps = []
    for dy in range(kh):
        for dx in range(kw):
            taps.append(x[:, :, dy:dy + stride * (Ho - 1) + 1:stride,
                             dx:dx + stride * (Wo - 1) + 1:stride])
    col = jnp.stack(taps, axis=0)                 # (kh*kw, C, N, Ho, Wo)
    return col.reshape(kh * kw * C, N * Ho * Wo), Ho, Wo


def _bn_affine(p):
    scale = p["gamma"] / jnp.sqrt(p["var"] + EPS)
    shift = p["beta"] - p["mean"] * scale
    return scale, shift


def _run_fused(col, w_cm, b, scale, shift, skip_cm_4d, act, N, Ho, Wo, cout):
    """Fold constants, call the Pallas kernel, stay channel-major."""
    M = N * Ho * Wo
    wT = (w_cm * scale[:, None]).astype(jnp.bfloat16)             # (Cout, K)
    shift_fold = (b * scale + shift).reshape(cout, 1).astype(jnp.float32)
    scale_col = scale.reshape(cout, 1).astype(jnp.float32)
    skip_cm = None
    if skip_cm_4d is not None:
        skip_cm = skip_cm_4d.reshape(cout, M).astype(jnp.bfloat16)
    y = fused_conv_matmul(col, wT, shift_fold, scale_col, skip_cm, act)
    return y.reshape(cout, N, Ho, Wo)                             # (C, N, H, W)


def conv_block(x_cm, p, stride, act, skip_cm):
    """Conv2d(k=3, padding=1, stride) + [skip] + BN + act (all fused)."""
    w, b = p["w"], p["b"]                        # (Cout, Cin, 3, 3) PyTorch
    cout, cin, kh, kw = w.shape
    N = x_cm.shape[1]
    col, Ho, Wo = im2col_cm(x_cm, kh, kw, stride, pad=1)
    w_cm = jnp.transpose(w, (0, 2, 3, 1)).reshape(cout, kh * kw * cin)
    scale, shift = _bn_affine(p)
    return _run_fused(col, w_cm, b, scale, shift, skip_cm, act, N, Ho, Wo, cout)


def convT_block(x_cm, p, stride, out_pad, act, skip_cm):
    """ConvTranspose2d(k=3, padding=1, stride, out_pad) + [skip] + BN + act."""
    w, b = p["w"], p["b"]                        # (Cin, Cout, 3, 3) PyTorch
    cin, cout, kh, kw = w.shape
    # Equivalent stride-1 conv on zero-dilated/padded input with flipped kernel.
    w_conv = jnp.transpose(jnp.flip(w, axis=(2, 3)), (1, 0, 2, 3))  # (Cout,Cin,3,3)
    C, N, H, W = x_cm.shape
    if stride > 1:
        xd = jnp.zeros((C, N, (H - 1) * stride + 1, (W - 1) * stride + 1),
                       x_cm.dtype)
        xd = xd.at[:, :, ::stride, ::stride].set(x_cm)
    else:
        xd = x_cm
    p0 = kh - 1 - 1                              # kernel=3, padding=1 -> 1
    p1 = p0 + out_pad
    xd = jnp.pad(xd, ((0, 0), (0, 0), (p0, p1), (p0, p1)))
    col, Ho, Wo = im2col_cm(xd, kh, kw, stride=1, pad=0)
    w_cm = jnp.transpose(w_conv, (0, 2, 3, 1)).reshape(cout, kh * kw * cin)
    scale, shift = _bn_affine(p)
    return _run_fused(col, w_cm, b, scale, shift, skip_cm, act, N, Ho, Wo, cout)


# --------------------------------------------------------------------------
# Deterministic parameter construction (mirrors the PyTorch __init__ logic).
# Strides / output_padding go into a STATIC config (not the jitted pytree).
# --------------------------------------------------------------------------
def _init_conv(key, cin, cout, k=3):
    kw_, kb_ = jax.random.split(key)
    bound = 1.0 / (cin * k * k) ** 0.5
    w = jax.random.uniform(kw_, (cout, cin, k, k), jnp.float32, -bound, bound)
    b = jax.random.uniform(kb_, (cout,), jnp.float32, -bound, bound)
    return w, b


def _init_convT(key, cin, cout, k=3):
    kw_, kb_ = jax.random.split(key)
    bound = 1.0 / (cout * k * k) ** 0.5
    w = jax.random.uniform(kw_, (cin, cout, k, k), jnp.float32, -bound, bound)
    b = jax.random.uniform(kb_, (cout,), jnp.float32, -bound, bound)
    return w, b


def _init_bn(key, c):
    k1, k2, k3, k4 = jax.random.split(key, 4)
    return dict(
        gamma=jax.random.uniform(k1, (c,), jnp.float32, 0.5, 1.5),
        beta=jax.random.uniform(k2, (c,), jnp.float32, -0.5, 0.5),
        mean=0.1 * jax.random.normal(k3, (c,), jnp.float32),
        var=jax.random.uniform(k4, (c,), jnp.float32, 0.5, 1.5),
    )


def build_model(key, input_channels, num_layers, stride_interval,
                channels_interval, base_channel):
    # ---- Encoder.__init__ ----
    enc_params, enc_strides = [], []
    in_c, out_c, remain = input_channels, base_channel, 0
    for i in range(num_layers):
        if i % channels_interval == 0 and i != 0:
            out_c *= 2
            remain = 0
        stride = 2 if (i + 1) % stride_interval == 0 else 1
        key, k1, k2 = jax.random.split(key, 3)
        w, b = _init_conv(k1, in_c, out_c)
        enc_params.append(dict(w=w, b=b, **_init_bn(k2, out_c)))
        enc_strides.append(stride)
        in_c = out_c
        remain += 1

    # ---- Autoencoder.__init__ base-channel scaling ----
    if num_layers % channels_interval == 0:
        exp = num_layers // channels_interval - 1
    else:
        exp = num_layers // channels_interval
    base = base_channel * (2 ** exp)

    # ---- Decoder.__init__ ----
    dec_params, dec_strides = [], []
    in_c = out_c = base
    cont_c, cont_s = remain - 1, 0
    for _ in range(num_layers - 1):
        if cont_c == 0:
            out_c //= 2
            cont_c = channels_interval
        cont_c -= 1
        if cont_s == 0:
            stride, cont_s = 2, stride_interval
        else:
            stride = 1
        cont_s -= 1
        out_pad = 1 if stride == 2 else 0
        key, k1, k2 = jax.random.split(key, 3)
        w, b = _init_convT(k1, in_c, out_c)
        dec_params.append(dict(w=w, b=b, **_init_bn(k2, out_c)))
        dec_strides.append((stride, out_pad))
        in_c = out_c
    key, k1, k2 = jax.random.split(key, 3)
    w, b = _init_convT(k1, in_c, input_channels)
    final = dict(w=w, b=b, **_init_bn(k2, input_channels))

    params = dict(enc=enc_params, dec=dec_params, final=final)
    config = dict(enc_strides=tuple(enc_strides),
                  dec_strides=tuple(dec_strides),
                  num_layers=num_layers,
                  stride_interval=stride_interval)
    return params, config


# --------------------------------------------------------------------------
# Autoencoder forward (Encoder -> Decoder with skip connections)
# --------------------------------------------------------------------------
def autoencoder_forward(x_nchw, params, config):
    num_layers = config["num_layers"]
    stride_interval = config["stride_interval"]

    # NCHW -> channel-major (C, N, H, W); bf16 activations between layers.
    x = jnp.transpose(x_nchw, (1, 0, 2, 3)).astype(jnp.bfloat16)

    # Encoder
    skips = [x]
    for i, (p, stride) in enumerate(zip(params["enc"], config["enc_strides"])):
        x = conv_block(x, p, stride, act="relu", skip_cm=None)
        if (i + 1) % stride_interval == 0 and (i + 1) != num_layers:
            skips.append(x)

    # Decoder (skip added BEFORE BatchNorm, as in the PyTorch module)
    total_skips = len(skips)
    for cont, (p, (stride, out_pad)) in enumerate(
            zip(params["dec"], config["dec_strides"])):
        skip = None
        if (cont + 1) % stride_interval == 0 and cont != 0:
            skip = skips[total_skips - 1]
            total_skips -= 1
        x = convT_block(x, p, stride, out_pad, act="relu", skip_cm=skip)
    x = convT_block(x, params["final"], 1, 0, act="sigmoid", skip_cm=skips[0])

    # channel-major -> NCHW, f32 at the network boundary only.
    return jnp.transpose(x, (1, 0, 2, 3)).astype(jnp.float32)


# --------------------------------------------------------------------------
if __name__ == "__main__":
    INPUT_CHANNELS = 4
    NUM_LAYERS = 4
    STRIDE_INTERVAL = 2
    CHANNELS_INTERVAL = 2
    BASE_CHANNEL = 8

    key = jax.random.PRNGKey(0)
    kp, kx = jax.random.split(key)
    params, config = build_model(kp, INPUT_CHANNELS, NUM_LAYERS,
                                 STRIDE_INTERVAL, CHANNELS_INTERVAL,
                                 BASE_CHANNEL)

    x = jax.random.normal(kx, (2, INPUT_CHANNELS, 16, 16), jnp.float32)

    fwd = jax.jit(functools.partial(autoencoder_forward, config=config))
    y = fwd(x, params)
    jax.block_until_ready(y)

    assert y.shape == (2, INPUT_CHANNELS, 16, 16), y.shape
    assert bool(jnp.all(jnp.isfinite(y)))
    assert bool(jnp.all((y >= 0.0) & (y <= 1.0)))   # final sigmoid range
    print("KERNEL_OK")
</pallas_src>

<mosaic_0001>
module attributes {stable_mosaic.version = 11 : i64} {
  func.func @_fused_kernel_noskip(%arg0: i32, %arg1: memref<36x256xbf16, #tpu.memory_space<vmem>>, %arg2: memref<8x36xbf16, #tpu.memory_space<vmem>>, %arg3: memref<8x1xf32, #tpu.memory_space<vmem>>, %arg4: memref<8x256xbf16, #tpu.memory_space<vmem>>) attributes {dimension_semantics = [#tpu.dimension_semantics<parallel>], iteration_bounds = array<i64: 2>, scalar_prefetch = 0 : i64, scratch_operands = 0 : i64, tpu.core_type = #tpu.core_type<tc>, window_params = [{transform_indices = @transform_0, window_bounds = array<i64: 36, 256>}, {pipeline_mode = #tpu.pipeline_mode<synchronous>, transform_indices = @transform_1, window_bounds = array<i64: 8, 36>}, {pipeline_mode = #tpu.pipeline_mode<synchronous>, transform_indices = @transform_2, window_bounds = array<i64: 8, 1>}, {transform_indices = @transform_3, window_bounds = array<i64: 8, 256>}]} {
    %c0 = arith.constant 0 : index
    %c0_0 = arith.constant 0 : index
    %0 = vector.load %arg2[%c0, %c0_0] : memref<8x36xbf16, #tpu.memory_space<vmem>>, vector<8x36xbf16>
    %c0_1 = arith.constant 0 : index
    %c0_2 = arith.constant 0 : index
    %1 = vector.load %arg1[%c0_1, %c0_2] : memref<36x256xbf16, #tpu.memory_space<vmem>>, vector<36x256xbf16>
    %cst = arith.constant dense<0.000000e+00> : vector<8x256xf32>
    %2 = tpu.matmul %0, %1, %cst {dimension_numbers = #tpu.dot_dimension_numbers<[1], [0], [0], [1], [0, 0, 1, 1], [], []>} : vector<8x36xbf16>, vector<36x256xbf16>, vector<8x256xf32> -> vector<8x256xf32>
    %c0_3 = arith.constant 0 : index
    %c0_4 = arith.constant 0 : index
    %3 = vector.load %arg3[%c0_3, %c0_4] : memref<8x1xf32, #tpu.memory_space<vmem>>, vector<8x1xf32>
    %4 = vector.broadcast %3 : vector<8x1xf32> to vector<8x256xf32>
    %5 = arith.addf %2, %4 : vector<8x256xf32>
    %cst_5 = arith.constant 0.000000e+00 : f32
    %6 = vector.broadcast %cst_5 : f32 to vector<8x256xf32>
    %7 = arith.maximumf %5, %6 : vector<8x256xf32>
    %8 = arith.truncf %7 : vector<8x256xf32> to vector<8x256xbf16>
    %c0_6 = arith.constant 0 : index
    %c0_7 = arith.constant 0 : index
    %9 = vector.load %arg4[%c0_6, %c0_7] : memref<8x256xbf16, #tpu.memory_space<vmem>>, vector<8x256xbf16>
    tpu.vector_store %arg4[%c0_6, %c0_7], %8 {strides = array<i32>} : memref<8x256xbf16, #tpu.memory_space<vmem>>, vector<8x256xbf16>,
    return
  }
  func.func @transform_0(%arg0: i32) -> (i32, i32) {
    %c0_i32 = arith.constant 0 : i32
    %c0_i32_0 = arith.constant 0 : i32
    return %c0_i32, %arg0 : i32, i32
  }
  func.func @transform_1(%arg0: i32) -> (i32, i32) {
    %c0_i32 = arith.constant 0 : i32
    %c0_i32_0 = arith.constant 0 : i32
    %c0_i32_1 = arith.constant 0 : i32
    return %c0_i32, %c0_i32_0 : i32, i32
  }
  func.func @transform_2(%arg0: i32) -> (i32, i32) {
    %c0_i32 = arith.constant 0 : i32
    %c0_i32_0 = arith.constant 0 : i32
    %c0_i32_1 = arith.constant 0 : i32
    return %c0_i32, %c0_i32_0 : i32, i32
  }
  func.func @transform_3(%arg0: i32) -> (i32, i32) {
    %c0_i32 = arith.constant 0 : i32
    %c0_i32_0 = arith.constant 0 : i32
    return %c0_i32, %arg0 : i32, i32
  }
}

module attributes {stable_mosaic.version = 11 : i64} {
  func.func @_fused_kernel_noskip(%arg0: i32, %arg1: memref<72x128xbf16, #tpu.memory_space<vmem>>, %arg2: memref<8x72xbf16, #tpu.memory_space<vmem>>, %arg3: memref<8x1xf32, #tpu.memory_space<vmem>>, %arg4: memref<8x128xbf16, #tpu.memory_space<vmem>>) attributes {dimension_semantics = [#tpu.dimension_semantics<parallel>], iteration_bounds = array<i64: 1>, scalar_prefetch = 0 : i64, scratch_operands = 0 : i64, tpu.core_type = #tpu.core_type<tc>, window_params = [{transform_indices = @transform_0, window_bounds = array<i64: 72, 128>}, {pipeline_mode = #tpu.pipeline_mode<synchronous>, transform_indices = @transform_1, window_bounds = array<i64: 8, 72>}, {pipeline_mode = #tpu.pipeline_mode<synchronous>, transform_indices = @transform_2, window_bounds = array<i64: 8, 1>}, {transform_indices = @transform_3, window_bounds = array<i64: 8, 128>}]} {
    %c0 = arith.constant 0 : index
    %c0_0 = arith.constant 0 : index
    %0 = vector.load %arg2[%c0, %c0_0] : memref<8x72xbf16, #tpu.memory_space<vmem>>, vector<8x72xbf16>
    %c0_1 = arith.constant 0 : index
    %c0_2 = arith.constant 0 : index
    %1 = vector.load %arg1[%c0_1, %c0_2] : memref<72x128xbf16, #tpu.memory_space<vmem>>, vector<72x128xbf16>
    %cst = arith.constant dense<0.000000e+00> : vector<8x128xf32>
    %2 = tpu.matmul %0, %1, %cst {dimension_numbers = #tpu.dot_dimension_numbers<[1], [0], [0], [1], [0, 0, 1, 1], [], []>} : vector<8x72xbf16>, vector<72x128xbf16>, vector<8x128xf32> -> vector<8x128xf32>
    %c0_3 = arith.constant 0 : index
    %c0_4 = arith.constant 0 : index
    %3 = vector.load %arg3[%c0_3, %c0_4] : memref<8x1xf32, #tpu.memory_space<vmem>>, vector<8x1xf32>
    %4 = vector.broadcast %3 : vector<8x1xf32> to vector<8x128xf32>
    %5 = arith.addf %2, %4 : vector<8x128xf32>
    %cst_5 = arith.constant 0.000000e+00 : f32
    %6 = vector.broadcast %cst_5 : f32 to vector<8x128xf32>
    %7 = arith.maximumf %5, %6 : vector<8x128xf32>
    %8 = arith.truncf %7 : vector<8x128xf32> to vector<8x128xbf16>
    %c0_6 = arith.constant 0 : index
    %c0_7 = arith.constant 0 : index
    %9 = vector.load %arg4[%c0_6, %c0_7] : memref<8x128xbf16, #tpu.memory_space<vmem>>, vector<8x128xbf16>
    tpu.vector_store %arg4[%c0_6, %c0_7], %8 {strides = array<i32>} : memref<8x128xbf16, #tpu.memory_space<vmem>>, vector<8x128xbf16>,
    return
  }
  func.func @transform_0(%arg0: i32) -> (i32, i32) {
    %c0_i32 = arith.constant 0 : i32
    %c0_i32_0 = arith.constant 0 : i32
    return %c0_i32, %arg0 : i32, i32
  }
  func.func @transform_1(%arg0: i32) -> (i32, i32) {
    %c0_i32 = arith.constant 0 : i32
    %c0_i32_0 = arith.constant 0 : i32
    %c0_i32_1 = arith.constant 0 : i32
    return %c0_i32, %c0_i32_0 : i32, i32
  }
  func.func @transform_2(%arg0: i32) -> (i32, i32) {
    %c0_i32 = arith.constant 0 : i32
    %c0_i32_0 = arith.constant 0 : i32
    %c0_i32_1 = arith.constant 0 : i32
    return %c0_i32, %c0_i32_0 : i32, i32
  }
  func.func @transform_3(%arg0: i32) -> (i32, i32) {
    %c0_i32 = arith.constant 0 : i32
    %c0_i32_0 = arith.constant 0 : i32
    return %c0_i32, %arg0 : i32, i32
  }
}

module attributes {stable_mosaic.version = 11 : i64} {
  func.func @_fused_kernel_noskip(%arg0: i32, %arg1: memref<72x128xbf16, #tpu.memory_space<vmem>>, %arg2: memref<16x72xbf16, #tpu.memory_space<vmem>>, %arg3: memref<16x1xf32, #tpu.memory_space<vmem>>, %arg4: memref<16x128xbf16, #tpu.memory_space<vmem>>) attributes {dimension_semantics = [#tpu.dimension_semantics<parallel>], iteration_bounds = array<i64: 1>, scalar_prefetch = 0 : i64, scratch_operands = 0 : i64, tpu.core_type = #tpu.core_type<tc>, window_params = [{transform_indices = @transform_0, window_bounds = array<i64: 72, 128>}, {pipeline_mode = #tpu.pipeline_mode<synchronous>, transform_indices = @transform_1, window_bounds = array<i64: 16, 72>}, {pipeline_mode = #tpu.pipeline_mode<synchronous>, transform_indices = @transform_2, window_bounds = array<i64: 16, 1>}, {transform_indices = @transform_3, window_bounds = array<i64: 16, 128>}]} {
    %c0 = arith.constant 0 : index
    %c0_0 = arith.constant 0 : index
    %0 = vector.load %arg2[%c0, %c0_0] : memref<16x72xbf16, #tpu.memory_space<vmem>>, vector<16x72xbf16>
    %c0_1 = arith.constant 0 : index
    %c0_2 = arith.constant 0 : index
    %1 = vector.load %arg1[%c0_1, %c0_2] : memref<72x128xbf16, #tpu.memory_space<vmem>>, vector<72x128xbf16>
    %cst = arith.constant dense<0.000000e+00> : vector<16x128xf32>
    %2 = tpu.matmul %0, %1, %cst {dimension_numbers = #tpu.dot_dimension_numbers<[1], [0], [0], [1], [0, 0, 1, 1], [], []>} : vector<16x72xbf16>, vector<72x128xbf16>, vector<16x128xf32> -> vector<16x128xf32>
    %c0_3 = arith.constant 0 : index
    %c0_4 = arith.constant 0 : index
    %3 = vector.load %arg3[%c0_3, %c0_4] : memref<16x1xf32, #tpu.memory_space<vmem>>, vector<16x1xf32>
    %4 = vector.broadcast %3 : vector<16x1xf32> to vector<16x128xf32>
    %5 = arith.addf %2, %4 : vector<16x128xf32>
    %cst_5 = arith.constant 0.000000e+00 : f32
    %6 = vector.broadcast %cst_5 : f32 to vector<16x128xf32>
    %7 = arith.maximumf %5, %6 : vector<16x128xf32>
    %8 = arith.truncf %7 : vector<16x128xf32> to vector<16x128xbf16>
    %c0_6 = arith.constant 0 : index
    %c0_7 = arith.constant 0 : index
    %9 = vector.load %arg4[%c0_6, %c0_7] : memref<16x128xbf16, #tpu.memory_space<vmem>>, vector<16x128xbf16>
    tpu.vector_store %arg4[%c0_6, %c0_7], %8 {strides = array<i32>} : memref<16x128xbf16, #tpu.memory_space<vmem>>, vector<16x128xbf16>,
    return
  }
  func.func @transform_0(%arg0: i32) -> (i32, i32) {
    %c0_i32 = arith.constant 0 : i32
    %c0_i32_0 = arith.constant 0 : i32
    return %c0_i32, %arg0 : i32, i32
  }
  func.func @transform_1(%arg0: i32) -> (i32, i32) {
    %c0_i32 = arith.constant 0 : i32
    %c0_i32_0 = arith.constant 0 : i32
    %c0_i32_1 = arith.constant 0 : i32
    return %c0_i32, %c0_i32_0 : i32, i32
  }
  func.func @transform_2(%arg0: i32) -> (i32, i32) {
    %c0_i32 = arith.constant 0 : i32
    %c0_i32_0 = arith.constant 0 : i32
    %c0_i32_1 = arith.constant 0 : i32
    return %c0_i32, %c0_i32_0 : i32, i32
  }
  func.func @transform_3(%arg0: i32) -> (i32, i32) {
    %c0_i32 = arith.constant 0 : i32
    %c0_i32_0 = arith.constant 0 : i32
    return %c0_i32, %arg0 : i32, i32
  }
}

module attributes {stable_mosaic.version = 11 : i64} {
  func.func @_fused_kernel_noskip(%arg0: i32, %arg1: memref<144x128xbf16, #tpu.memory_space<vmem>>, %arg2: memref<16x144xbf16, #tpu.memory_space<vmem>>, %arg3: memref<16x1xf32, #tpu.memory_space<vmem>>, %arg4: memref<16x128xbf16, #tpu.memory_space<vmem>>) attributes {dimension_semantics = [#tpu.dimension_semantics<parallel>], iteration_bounds = array<i64: 1>, scalar_prefetch = 0 : i64, scratch_operands = 0 : i64, tpu.core_type = #tpu.core_type<tc>, window_params = [{transform_indices = @transform_0, window_bounds = array<i64: 144, 128>}, {pipeline_mode = #tpu.pipeline_mode<synchronous>, transform_indices = @transform_1, window_bounds = array<i64: 16, 144>}, {pipeline_mode = #tpu.pipeline_mode<synchronous>, transform_indices = @transform_2, window_bounds = array<i64: 16, 1>}, {transform_indices = @transform_3, window_bounds = array<i64: 16, 128>}]} {
    %c0 = arith.constant 0 : index
    %c0_0 = arith.constant 0 : index
    %0 = vector.load %arg2[%c0, %c0_0] : memref<16x144xbf16, #tpu.memory_space<vmem>>, vector<16x144xbf16>
    %c0_1 = arith.constant 0 : index
    %c0_2 = arith.constant 0 : index
    %1 = vector.load %arg1[%c0_1, %c0_2] : memref<144x128xbf16, #tpu.memory_space<vmem>>, vector<144x128xbf16>
    %cst = arith.constant dense<0.000000e+00> : vector<16x128xf32>
    %2 = tpu.matmul %0, %1, %cst {dimension_numbers = #tpu.dot_dimension_numbers<[1], [0], [0], [1], [0, 0, 1, 1], [], []>} : vector<16x144xbf16>, vector<144x128xbf16>, vector<16x128xf32> -> vector<16x128xf32>
    %c0_3 = arith.constant 0 : index
    %c0_4 = arith.constant 0 : index
    %3 = vector.load %arg3[%c0_3, %c0_4] : memref<16x1xf32, #tpu.memory_space<vmem>>, vector<16x1xf32>
    %4 = vector.broadcast %3 : vector<16x1xf32> to vector<16x128xf32>
    %5 = arith.addf %2, %4 : vector<16x128xf32>
    %cst_5 = arith.constant 0.000000e+00 : f32
    %6 = vector.broadcast %cst_5 : f32 to vector<16x128xf32>
    %7 = arith.maximumf %5, %6 : vector<16x128xf32>
    %8 = arith.truncf %7 : vector<16x128xf32> to vector<16x128xbf16>
    %c0_6 = arith.constant 0 : index
    %c0_7 = arith.constant 0 : index
    %9 = vector.load %arg4[%c0_6, %c0_7] : memref<16x128xbf16, #tpu.memory_space<vmem>>, vector<16x128xbf16>
    tpu.vector_store %arg4[%c0_6, %c0_7], %8 {strides = array<i32>} : memref<16x128xbf16, #tpu.memory_space<vmem>>, vector<16x128xbf16>,
    return
  }
  func.func @transform_0(%arg0: i32) -> (i32, i32) {
    %c0_i32 = arith.constant 0 : i32
    %c0_i32_0 = arith.constant 0 : i32
    return %c0_i32, %arg0 : i32, i32
  }
  func.func @transform_1(%arg0: i32) -> (i32, i32) {
    %c0_i32 = arith.constant 0 : i32
    %c0_i32_0 = arith.constant 0 : i32
    %c0_i32_1 = arith.constant 0 : i32
    return %c0_i32, %c0_i32_0 : i32, i32
  }
  func.func @transform_2(%arg0: i32) -> (i32, i32) {
    %c0_i32 = arith.constant 0 : i32
    %c0_i32_0 = arith.constant 0 : i32
    %c0_i32_1 = arith.constant 0 : i32
    return %c0_i32, %c0_i32_0 : i32, i32
  }
  func.func @transform_3(%arg0: i32) -> (i32, i32) {
    %c0_i32 = arith.constant 0 : i32
    %c0_i32_0 = arith.constant 0 : i32
    return %c0_i32, %arg0 : i32, i32
  }
}

module attributes {stable_mosaic.version = 11 : i64} {
  func.func @_fused_kernel_skip(%arg0: i32, %arg1: memref<144x128xbf16, #tpu.memory_space<vmem>>, %arg2: memref<8x144xbf16, #tpu.memory_space<vmem>>, %arg3: memref<8x1xf32, #tpu.memory_space<vmem>>, %arg4: memref<8x1xf32, #tpu.memory_space<vmem>>, %arg5: memref<8x128xbf16, #tpu.memory_space<vmem>>, %arg6: memref<8x128xbf16, #tpu.memory_space<vmem>>) attributes {dimension_semantics = [#tpu.dimension_semantics<parallel>], iteration_bounds = array<i64: 1>, scalar_prefetch = 0 : i64, scratch_operands = 0 : i64, tpu.core_type = #tpu.core_type<tc>, window_params = [{transform_indices = @transform_0, window_bounds = array<i64: 144, 128>}, {pipeline_mode = #tpu.pipeline_mode<synchronous>, transform_indices = @transform_1, window_bounds = array<i64: 8, 144>}, {pipeline_mode = #tpu.pipeline_mode<synchronous>, transform_indices = @transform_2, window_bounds = array<i64: 8, 1>}, {pipeline_mode = #tpu.pipeline_mode<synchronous>, transform_indices = @transform_3, window_bounds = array<i64: 8, 1>}, {transform_indices = @transform_4, window_bounds = array<i64: 8, 128>}, {transform_indices = @transform_5, window_bounds = array<i64: 8, 128>}]} {
    %c0 = arith.constant 0 : index
    %c0_0 = arith.constant 0 : index
    %0 = vector.load %arg2[%c0, %c0_0] : memref<8x144xbf16, #tpu.memory_space<vmem>>, vector<8x144xbf16>
    %c0_1 = arith.constant 0 : index
    %c0_2 = arith.constant 0 : index
    %1 = vector.load %arg1[%c0_1, %c0_2] : memref<144x128xbf16, #tpu.memory_space<vmem>>, vector<144x128xbf16>
    %cst = arith.constant dense<0.000000e+00> : vector<8x128xf32>
    %2 = tpu.matmul %0, %1, %cst {dimension_numbers = #tpu.dot_dimension_numbers<[1], [0], [0], [1], [0, 0, 1, 1], [], []>} : vector<8x144xbf16>, vector<144x128xbf16>, vector<8x128xf32> -> vector<8x128xf32>
    %c0_3 = arith.constant 0 : index
    %c0_4 = arith.constant 0 : index
    %3 = vector.load %arg3[%c0_3, %c0_4] : memref<8x1xf32, #tpu.memory_space<vmem>>, vector<8x1xf32>
    %4 = vector.broadcast %3 : vector<8x1xf32> to vector<8x128xf32>
    %5 = arith.addf %2, %4 : vector<8x128xf32>
    %c0_5 = arith.constant 0 : index
    %c0_6 = arith.constant 0 : index
    %6 = vector.load %arg4[%c0_5, %c0_6] : memref<8x1xf32, #tpu.memory_space<vmem>>, vector<8x1xf32>
    %c0_7 = arith.constant 0 : index
    %c0_8 = arith.constant 0 : index
    %7 = vector.load %arg5[%c0_7, %c0_8] : memref<8x128xbf16, #tpu.memory_space<vmem>>, vector<8x128xbf16>
    %8 = arith.extf %7 : vector<8x128xbf16> to vector<8x128xf32>
    %9 = vector.broadcast %6 : vector<8x1xf32> to vector<8x128xf32>
    %10 = arith.mulf %9, %8 : vector<8x128xf32>
    %11 = arith.addf %5, %10 : vector<8x128xf32>
    %cst_9 = arith.constant 0.000000e+00 : f32
    %12 = vector.broadcast %cst_9 : f32 to vector<8x128xf32>
    %13 = arith.maximumf %11, %12 : vector<8x128xf32>
    %14 = arith.truncf %13 : vector<8x128xf32> to vector<8x128xbf16>
    %c0_10 = arith.constant 0 : index
    %c0_11 = arith.constant 0 : index
    %15 = vector.load %arg6[%c0_10, %c0_11] : memref<8x128xbf16, #tpu.memory_space<vmem>>, vector<8x128xbf16>
    tpu.vector_store %arg6[%c0_10, %c0_11], %14 {strides = array<i32>} : memref<8x128xbf16, #tpu.memory_space<vmem>>, vector<8x128xbf16>,
    return
  }
  func.func @transform_0(%arg0: i32) -> (i32, i32) {
    %c0_i32 = arith.constant 0 : i32
    %c0_i32_0 = arith.constant 0 : i32
    return %c0_i32, %arg0 : i32, i32
  }
  func.func @transform_1(%arg0: i32) -> (i32, i32) {
    %c0_i32 = arith.constant 0 : i32
    %c0_i32_0 = arith.constant 0 : i32
    %c0_i32_1 = arith.constant 0 : i32
    return %c0_i32, %c0_i32_0 : i32, i32
  }
  func.func @transform_2(%arg0: i32) -> (i32, i32) {
    %c0_i32 = arith.constant 0 : i32
    %c0_i32_0 = arith.constant 0 : i32
    %c0_i32_1 = arith.constant 0 : i32
    return %c0_i32, %c0_i32_0 : i32, i32
  }
  func.func @transform_3(%arg0: i32) -> (i32, i32) {
    %c0_i32 = arith.constant 0 : i32
    %c0_i32_0 = arith.constant 0 : i32
    %c0_i32_1 = arith.constant 0 : i32
    return %c0_i32, %c0_i32_0 : i32, i32
  }
  func.func @transform_4(%arg0: i32) -> (i32, i32) {
    %c0_i32 = arith.constant 0 : i32
    %c0_i32_0 = arith.constant 0 : i32
    return %c0_i32, %arg0 : i32, i32
  }
  func.func @transform_5(%arg0: i32) -> (i32, i32) {
    %c0_i32 = arith.constant 0 : i32
    %c0_i32_0 = arith.constant 0 : i32
    return %c0_i32, %arg0 : i32, i32
  }
}

module attributes {stable_mosaic.version = 11 : i64} {
  func.func @_fused_kernel_noskip(%arg0: i32, %arg1: memref<72x256xbf16, #tpu.memory_space<vmem>>, %arg2: memref<8x72xbf16, #tpu.memory_space<vmem>>, %arg3: memref<8x1xf32, #tpu.memory_space<vmem>>, %arg4: memref<8x256xbf16, #tpu.memory_space<vmem>>) attributes {dimension_semantics = [#tpu.dimension_semantics<parallel>], iteration_bounds = array<i64: 2>, scalar_prefetch = 0 : i64, scratch_operands = 0 : i64, tpu.core_type = #tpu.core_type<tc>, window_params = [{transform_indices = @transform_0, window_bounds = array<i64: 72, 256>}, {pipeline_mode = #tpu.pipeline_mode<synchronous>, transform_indices = @transform_1, window_bounds = array<i64: 8, 72>}, {pipeline_mode = #tpu.pipeline_mode<synchronous>, transform_indices = @transform_2, window_bounds = array<i64: 8, 1>}, {transform_indices = @transform_3, window_bounds = array<i64: 8, 256>}]} {
    %c0 = arith.constant 0 : index
    %c0_0 = arith.constant 0 : index
    %0 = vector.load %arg2[%c0, %c0_0] : memref<8x72xbf16, #tpu.memory_space<vmem>>, vector<8x72xbf16>
    %c0_1 = arith.constant 0 : index
    %c0_2 = arith.constant 0 : index
    %1 = vector.load %arg1[%c0_1, %c0_2] : memref<72x256xbf16, #tpu.memory_space<vmem>>, vector<72x256xbf16>
    %cst = arith.constant dense<0.000000e+00> : vector<8x256xf32>
    %2 = tpu.matmul %0, %1, %cst {dimension_numbers = #tpu.dot_dimension_numbers<[1], [0], [0], [1], [0, 0, 1, 1], [], []>} : vector<8x72xbf16>, vector<72x256xbf16>, vector<8x256xf32> -> vector<8x256xf32>
    %c0_3 = arith.constant 0 : index
    %c0_4 = arith.constant 0 : index
    %3 = vector.load %arg3[%c0_3, %c0_4] : memref<8x1xf32, #tpu.memory_space<vmem>>, vector<8x1xf32>
    %4 = vector.broadcast %3 : vector<8x1xf32> to vector<8x256xf32>
    %5 = arith.addf %2, %4 : vector<8x256xf32>
    %cst_5 = arith.constant 0.000000e+00 : f32
    %6 = vector.broadcast %cst_5 : f32 to vector<8x256xf32>
    %7 = arith.maximumf %5, %6 : vector<8x256xf32>
    %8 = arith.truncf %7 : vector<8x256xf32> to vector<8x256xbf16>
    %c0_6 = arith.constant 0 : index
    %c0_7 = arith.constant 0 : index
    %9 = vector.load %arg4[%c0_6, %c0_7] : memref<8x256xbf16, #tpu.memory_space<vmem>>, vector<8x256xbf16>
    tpu.vector_store %arg4[%c0_6, %c0_7], %8 {strides = array<i32>} : memref<8x256xbf16, #tpu.memory_space<vmem>>, vector<8x256xbf16>,
    return
  }
  func.func @transform_0(%arg0: i32) -> (i32, i32) {
    %c0_i32 = arith.constant 0 : i32
    %c0_i32_0 = arith.constant 0 : i32
    return %c0_i32, %arg0 : i32, i32
  }
  func.func @transform_1(%arg0: i32) -> (i32, i32) {
    %c0_i32 = arith.constant 0 : i32
    %c0_i32_0 = arith.constant 0 : i32
    %c0_i32_1 = arith.constant 0 : i32
    return %c0_i32, %c0_i32_0 : i32, i32
  }
  func.func @transform_2(%arg0: i32) -> (i32, i32) {
    %c0_i32 = arith.constant 0 : i32
    %c0_i32_0 = arith.constant 0 : i32
    %c0_i32_1 = arith.constant 0 : i32
    return %c0_i32, %c0_i32_0 : i32, i32
  }
  func.func @transform_3(%arg0: i32) -> (i32, i32) {
    %c0_i32 = arith.constant 0 : i32
    %c0_i32_0 = arith.constant 0 : i32
    return %c0_i32, %arg0 : i32, i32
  }
}

module attributes {stable_mosaic.version = 11 : i64} {
  func.func @_fused_kernel_skip(%arg0: i32, %arg1: memref<72x256xbf16, #tpu.memory_space<vmem>>, %arg2: memref<4x72xbf16, #tpu.memory_space<vmem>>, %arg3: memref<4x1xf32, #tpu.memory_space<vmem>>, %arg4: memref<4x1xf32, #tpu.memory_space<vmem>>, %arg5: memref<4x256xbf16, #tpu.memory_space<vmem>>, %arg6: memref<4x256xbf16, #tpu.memory_space<vmem>>) attributes {dimension_semantics = [#tpu.dimension_semantics<parallel>], iteration_bounds = array<i64: 2>, scalar_prefetch = 0 : i64, scratch_operands = 0 : i64, tpu.core_type = #tpu.core_type<tc>, window_params = [{transform_indices = @transform_0, window_bounds = array<i64: 72, 256>}, {pipeline_mode = #tpu.pipeline_mode<synchronous>, transform_indices = @transform_1, window_bounds = array<i64: 4, 72>}, {pipeline_mode = #tpu.pipeline_mode<synchronous>, transform_indices = @transform_2, window_bounds = array<i64: 4, 1>}, {pipeline_mode = #tpu.pipeline_mode<synchronous>, transform_indices = @transform_3, window_bounds = array<i64: 4, 1>}, {transform_indices = @transform_4, window_bounds = array<i64: 4, 256>}, {transform_indices = @transform_5, window_bounds = array<i64: 4, 256>}]} {
    %c0 = arith.constant 0 : index
    %c0_0 = arith.constant 0 : index
    %0 = vector.load %arg2[%c0, %c0_0] : memref<4x72xbf16, #tpu.memory_space<vmem>>, vector<4x72xbf16>
    %c0_1 = arith.constant 0 : index
    %c0_2 = arith.constant 0 : index
    %1 = vector.load %arg1[%c0_1, %c0_2] : memref<72x256xbf16, #tpu.memory_space<vmem>>, vector<72x256xbf16>
    %cst = arith.constant dense<0.000000e+00> : vector<4x256xf32>
    %2 = tpu.matmul %0, %1, %cst {dimension_numbers = #tpu.dot_dimension_numbers<[1], [0], [0], [1], [0, 0, 1, 1], [], []>} : vector<4x72xbf16>, vector<72x256xbf16>, vector<4x256xf32> -> vector<4x256xf32>
    %c0_3 = arith.constant 0 : index
    %c0_4 = arith.constant 0 : index
    %3 = vector.load %arg3[%c0_3, %c0_4] : memref<4x1xf32, #tpu.memory_space<vmem>>, vector<4x1xf32>
    %4 = vector.broadcast %3 : vector<4x1xf32> to vector<4x256xf32>
    %5 = arith.addf %2, %4 : vector<4x256xf32>
    %c0_5 = arith.constant 0 : index
    %c0_6 = arith.constant 0 : index
    %6 = vector.load %arg4[%c0_5, %c0_6] : memref<4x1xf32, #tpu.memory_space<vmem>>, vector<4x1xf32>
    %c0_7 = arith.constant 0 : index
    %c0_8 = arith.constant 0 : index
    %7 = vector.load %arg5[%c0_7, %c0_8] : memref<4x256xbf16, #tpu.memory_space<vmem>>, vector<4x256xbf16>
    %8 = arith.extf %7 : vector<4x256xbf16> to vector<4x256xf32>
    %9 = vector.broadcast %6 : vector<4x1xf32> to vector<4x256xf32>
    %10 = arith.mulf %9, %8 : vector<4x256xf32>
    %11 = arith.addf %5, %10 : vector<4x256xf32>
    %cst_9 = arith.constant 0.000000e+00 : f32
    %12 = vector.broadcast %cst_9 : f32 to vector<4x256xf32>
    %13 = arith.subf %12, %11 : vector<4x256xf32>
    %14 = math.exp %13 : vector<4x256xf32>
    %cst_10 = arith.constant 1.000000e+00 : f32
    %15 = vector.broadcast %cst_10 : f32 to vector<4x256xf32>
    %16 = arith.addf %15, %14 : vector<4x256xf32>
    %cst_11 = arith.constant 1.000000e+00 : f32
    %17 = vector.broadcast %cst_11 : f32 to vector<4x256xf32>
    %18 = arith.divf %17, %16 : vector<4x256xf32>
    %19 = arith.truncf %18 : vector<4x256xf32> to vector<4x256xbf16>
    %c0_12 = arith.constant 0 : index
    %c0_13 = arith.constant 0 : index
    %20 = vector.load %arg6[%c0_12, %c0_13] : memref<4x256xbf16, #tpu.memory_space<vmem>>, vector<4x256xbf16>
    tpu.vector_store %arg6[%c0_12, %c0_13], %19 {strides = array<i32>} : memref<4x256xbf16, #tpu.memory_space<vmem>>, vector<4x256xbf16>,
    return
  }
  func.func @transform_0(%arg0: i32) -> (i32, i32) {
    %c0_i32 = arith.constant 0 : i32
    %c0_i32_0 = arith.constant 0 : i32
    return %c0_i32, %arg0 : i32, i32
  }
  func.func @transform_1(%arg0: i32) -> (i32, i32) {
    %c0_i32 = arith.constant 0 : i32
    %c0_i32_0 = arith.constant 0 : i32
    %c0_i32_1 = arith.constant 0 : i32
    return %c0_i32, %c0_i32_0 : i32, i32
  }
  func.func @transform_2(%arg0: i32) -> (i32, i32) {
    %c0_i32 = arith.constant 0 : i32
    %c0_i32_0 = arith.constant 0 : i32
    %c0_i32_1 = arith.constant 0 : i32
    return %c0_i32, %c0_i32_0 : i32, i32
  }
  func.func @transform_3(%arg0: i32) -> (i32, i32) {
    %c0_i32 = arith.constant 0 : i32
    %c0_i32_0 = arith.constant 0 : i32
    %c0_i32_1 = arith.constant 0 : i32
    return %c0_i32, %c0_i32_0 : i32, i32
  }
  func.func @transform_4(%arg0: i32) -> (i32, i32) {
    %c0_i32 = arith.constant 0 : i32
    %c0_i32_0 = arith.constant 0 : i32
    return %c0_i32, %arg0 : i32, i32
  }
  func.func @transform_5(%arg0: i32) -> (i32, i32) {
    %c0_i32 = arith.constant 0 : i32
    %c0_i32_0 = arith.constant 0 : i32
    return %c0_i32, %arg0 : i32, i32
  }
}

</mosaic_0001>

<llo_original>
// kernel: autoencoder_forward.8
$region0: #{autoencoder_forward.8}
  #allocation0 [shape = 'u32[]', space=smem, size = 0x4, offset = 0x4, fixed_abs, tag = 'smem constant byte address 0x4 - core index']
  #allocation1 [shape = 'u32[144,128]{1,0:T(1,128)}', space=vmem, size = 0x12000, scoped, tag = 'internal scratch']
  %s0 = inlined_call_operand.vmem [shape: bf16[36,512], index: 0, kind: input, shape index: {}]
  %s1 = inlined_call_operand.vmem [shape: bf16[8,36], index: 1, kind: input, shape index: {}]
  %s2 = inlined_call_operand.vmem [shape: f32[8,1], index: 2, kind: input, shape index: {}]
  %s3 = inlined_call_operand.vmem [shape: bf16[8,512], index: 3, kind: output, shape index: {}]
  %s4 = sld [smem:[#allocation0]]
  $region83: #{autoencoder_forward.8} parent=0
    _
  %s6 = ssub.s32 1, %s4
  %s7 = scalar_select 0, %s6, %s4
  $region1: #{autoencoder_forward.8} parent=0
    #allocation2 [shape = 'u8[40960]{0}', space=vmem, size = 0xa000, scoped, tag = 'input window, operand 0']
    loop: start=0, step=1, limit=4
    $region2: #{autoencoder_forward.8} parent=1 // loop_pre_header
      _
    $region3: #{autoencoder_forward.8} parent=1 // loop_header
      %s9 = sphi 0, %s13
      %p10 = scmp.ge.s32.totalorder %s9, 4
      %s19 = sphi 0, %s21
      %s22 = sphi 0, %s19
      %s23 = sphi 0, %s22
      %s39 = sphi 0, %s23
      %s43 = sphi 0, %s43
      %s45 = sphi 0, %s43
      %s46 = sphi 0, %s45
      %s60 = sphi 0, %s46
      %s64 = sphi 0, %s64
      %s66 = sphi 0, %s64
      %s67 = sphi 0, %s66
      %s81 = sphi 0, %s67
      %s87 = sphi 0, %s89
      %s90 = sphi 0, %s87
      %s91 = sphi 0, %s90
      %s107 = sphi 0, %s91
    $region4: #{autoencoder_forward.8} parent=1 // loop_header_branch
      %12 = sbr.rel (%p10) target = $region8
    $region5: #{autoencoder_forward.8} parent=1 // loop_body
      %s14 = ssub.s32 %s9, 1
      %s15 = ssub.s32 %s9, 2
      %s16 = sadd.s32 %s9, 1
      %s17 = ssub.s32 %s9, %s16
      %p18 = scmp.eq.s32.totalorder %s17, 0
      %s20 = sadd.s32 %s19, 1
      %s21 = scalar_select %p18, %s19, %s20
      %p24 = pneg %p18
      %p25 = scmp.eq.s32.totalorder %s9, 1
      %p26 = por %p24, %p25
      %p27 = scmp.ne.s32.totalorder %s19, %s22
      %p28 = scmp.eq.s32.totalorder %s9, 0
      %p29 = por %p27, %p28
      %p30 = scmp.ne.s32.totalorder %s19, %s22
      %p31 = scmp.eq.s32.totalorder %s14, 1
      %p32 = por %p30, %p31
      %p33 = scmp.ne.s32.totalorder %s22, %s23
      %p34 = scmp.eq.s32.totalorder %s14, 0
      %p35 = por %p33, %p34
      %p36 = scmp.ne.s32.totalorder %s22, %s23
      %p37 = scmp.eq.s32.totalorder %s15, 1
      %p38 = por %p36, %p37
      %p40 = scmp.ne.s32.totalorder %s23, %s39
      %p41 = scmp.eq.s32.totalorder %s15, 0
      %p42 = por %p40, %p41
      %s44 = sadd.s32 %s43, 1
      %p47 = scmp.eq.s32.totalorder %s9, 1
      %p48 = scmp.ne.s32.totalorder %s43, %s45
      %p49 = scmp.eq.s32.totalorder %s9, 0
      %p50 = por %p48, %p49
      %p51 = scmp.ne.s32.totalorder %s43, %s45
      %p52 = scmp.eq.s32.totalorder %s14, 1
      %p53 = por %p51, %p52
      %p54 = scmp.ne.s32.totalorder %s45, %s46
      %p55 = scmp.eq.s32.totalorder %s14, 0
      %p56 = por %p54, %p55
      %p57 = scmp.ne.s32.totalorder %s45, %s46
      %p58 = scmp.eq.s32.totalorder %s15, 1
      %p59 = por %p57, %p58
      %p61 = scmp.ne.s32.totalorder %s46, %s60
      %p62 = scmp.eq.s32.totalorder %s15, 0
      %p63 = por %p61, %p62
      %s65 = sadd.s32 %s64, 1
      %p68 = scmp.eq.s32.totalorder %s9, 1
      %p69 = scmp.ne.s32.totalorder %s64, %s66
      %p70 = scmp.eq.s32.totalorder %s9, 0
      %p71 = por %p69, %p70
      %p72 = scmp.ne.s32.totalorder %s64, %s66
      %p73 = scmp.eq.s32.totalorder %s14, 1
      %p74 = por %p72, %p73
      %p75 = scmp.ne.s32.totalorder %s66, %s67
      %p76 = scmp.eq.s32.totalorder %s14, 0
      %p77 = por %p75, %p76
      %p78 = scmp.ne.s32.totalorder %s66, %s67
      %p79 = scmp.eq.s32.totalorder %s15, 1
      %p80 = por %p78, %p79
      %p82 = scmp.ne.s32.totalorder %s67, %s81
      %p83 = scmp.eq.s32.totalorder %s15, 0
      %p84 = por %p82, %p83
      %s85 = ssub.s32 %s9, %s16
      %p86 = scmp.eq.s32.totalorder %s85, 0
      %s88 = sadd.s32 %s87, 1
      %s89 = scalar_select %p86, %s87, %s88
      %p92 = pneg %p86
      %p93 = scmp.eq.s32.totalorder %s9, 1
      %p94 = por %p92, %p93
      %p95 = scmp.ne.s32.totalorder %s87, %s90
      %p96 = scmp.eq.s32.totalorder %s9, 0
      %p97 = por %p95, %p96
      %p98 = scmp.ne.s32.totalorder %s87, %s90
      %p99 = scmp.eq.s32.totalorder %s14, 1
      %p100 = por %p98, %p99
      %p101 = scmp.ne.s32.totalorder %s90, %s91
      %p102 = scmp.eq.s32.totalorder %s14, 0
      %p103 = por %p101, %p102
      %p104 = scmp.ne.s32.totalorder %s90, %s91
      %p105 = scmp.eq.s32.totalorder %s15, 1
      %p106 = por %p104, %p105
      %p108 = scmp.ne.s32.totalorder %s91, %s107
      %p109 = scmp.eq.s32.totalorder %s15, 0
      %p110 = por %p108, %p109
      %p111 = scmp.le.s32.totalorder 1, %s9
      %p112 = scmp.lt.s32.totalorder %s9, 3
      %p113 = pnand %p111, %p112
      %p114 = pneg %p113
      // Predicated region
      $region9: #{autoencoder_forward.8} parent=5 // pred_check
        _
      $region10: #{autoencoder_forward.8} parent=5 // pred_check_branch
        %116 = sbr.rel (%p113) target = $region12
      $region11: #{autoencoder_forward.8} parent=5 // pred_region
        %s117 = ssub.s32 %s9, 1
        // Predicated region
        $region13: #{autoencoder_forward.8} parent=11 // pred_check
          %p118 = pneg %p56
        $region14: #{autoencoder_forward.8} parent=11 // pred_check_branch
          %120 = sbr.rel (%p118) target = $region16
        $region15: #{autoencoder_forward.8} parent=11 // pred_region
          _
        $region16: #{autoencoder_forward.8} parent=11 // pred_fallthru
          _
        // Predicated region
        $region17: #{autoencoder_forward.8} parent=11 // pred_check
          %p121 = pneg %p77
        $region18: #{autoencoder_forward.8} parent=11 // pred_check_branch
          %123 = sbr.rel (%p121) target = $region20
        $region19: #{autoencoder_forward.8} parent=11 // pred_region
          _
        $region20: #{autoencoder_forward.8} parent=11 // pred_fallthru
          _
      $region12: #{autoencoder_forward.8} parent=5 // pred_fallthru
        _
      %p124 = scmp.lt.s32.totalorder %s9, 2
      // Predicated region
      $region21: #{autoencoder_forward.8} parent=5 // pred_check
        %p125 = pneg %p124
      $region22: #{autoencoder_forward.8} parent=5 // pred_check_branch
        %127 = sbr.rel (%p125) target = $region24
      $region23: #{autoencoder_forward.8} parent=5 // pred_region
        // Predicated region
        $region25: #{autoencoder_forward.8} parent=23 // pred_check
          %p128 = pneg %p29
        $region26: #{autoencoder_forward.8} parent=23 // pred_check_branch
          %130 = sbr.rel (%p128) target = $region28
        $region27: #{autoencoder_forward.8} parent=23 // pred_region
          %s131 = sand.u32 %s19, 1
          %s132 = sand.u32 %s19, 1
          %s133 = smul.addr %s132, 40
          %s134 = scalar_lea.vmem [#allocation2], %s133
          %s135 = smul.u32 2, %s9
          %s136 = smul.addr %s135, 4
          %s137 = scalar_lea.vmem %s0, %s136
          // Predicated region
          $region29: #{autoencoder_forward.8} parent=27 // pred_check
            _
          $region30: #{autoencoder_forward.8} parent=27 // pred_check_branch
            %139 = sbr.rel (0) target = $region32
          $region31: #{autoencoder_forward.8} parent=27 // pred_region
            // Predicated region
            $region33: #{autoencoder_forward.8} parent=31 // pred_check
              _
            $region34: #{autoencoder_forward.8} parent=31 // pred_check_branch
              %141 = sbr.rel (0) target = $region36
            $region35: #{autoencoder_forward.8} parent=31 // pred_region
              // Predicated region
              $region48: #{autoencoder_forward.8} parent=35 // pred_check
                _
              $region49: #{autoencoder_forward.8} parent=35 // pred_check_branch
                %164 = sbr.rel (0) target = $region51
              $region50: #{autoencoder_forward.8} parent=35 // pred_region
                loop: start=0, step=1, limit=1
                $region52: #{autoencoder_forward.8} parent=50 // loop_pre_header
                  _
                $region53: #{autoencoder_forward.8} parent=50 // loop_header
                  %s166 = sphi 0, %s170
                  %p167 = scmp.ge.s32.totalorder %s166, 1
                  %s171 = sphi %s137, %s137
                  %s172 = sphi %s134, %s134
                $region54: #{autoencoder_forward.8} parent=50 // loop_header_branch
                  %169 = sbr.rel (%p167) target = $region58
                $region55: #{autoencoder_forward.8} parent=50 // loop_body
                  %v173 = vld [vmem:[%s171] sm:$0xff]
                  %174 = vst [vmem:[%s172] sm:$0xff] %v173
                  %v175 = vld [vmem:[%s171 + $0x10] sm:$0xff]
                  %176 = vst [vmem:[%s172 + $0x8] sm:$0xff] %v175
                  %v177 = vld [vmem:[%s171 + $0x20] sm:$0xff]
                  %178 = vst [vmem:[%s172 + $0x10] sm:$0xff] %v177
                  %v179 = vld [vmem:[%s171 + $0x30] sm:$0xff]
                  %180 = vst [vmem:[%s172 + $0x18] sm:$0xff] %v179
                  %v181 = vld [vmem:[%s171 + $0x40] sm:$0xff]
                  %182 = vst [vmem:[%s172 + $0x20] sm:$0xff] %v181
                $region56: #{autoencoder_forward.8} parent=50 // loop_footer
                  %s170 = sadd.s32 1, %s166
                $region57: #{autoencoder_forward.8} parent=50 // loop_footer_branch
                  %165 = sbr.rel target = $region53
                $region58: #{autoencoder_forward.8} parent=50 // loop_exit
                  _
              $region51: #{autoencoder_forward.8} parent=35 // pred_fallthru
                _
              // Predicated region
              $region59: #{autoencoder_forward.8} parent=35 // pred_check
                _
              $region60: #{autoencoder_forward.8} parent=35 // pred_check_branch
                %184 = sbr.rel target = $region62
              $region61: #{autoencoder_forward.8} parent=35 // pred_region
                _
              $region62: #{autoencoder_forward.8} parent=35 // pred_fallthru
                _
            $region36: #{autoencoder_forward.8} parent=31 // pred_fallthru
              _
            // Predicated region
            $region37: #{autoencoder_forward.8} parent=31 // pred_check
              _
            $region38: #{autoencoder_forward.8} parent=31 // pred_check_branch
              %143 = sbr.rel target = $region40
            $region39: #{autoencoder_forward.8} parent=31 // pred_region
              loop: start=0, step=1, limit=1
              $region41: #{autoencoder_forward.8} parent=39 // loop_pre_header
                _
              $region42: #{autoencoder_forward.8} parent=39 // loop_header
                %s146 = sphi 0, %s150
                %p147 = scmp.ge.s32.totalorder %s146, 1
                %s151 = sphi %s137, %s137
                %s152 = sphi %s134, %s134
              $region43: #{autoencoder_forward.8} parent=39 // loop_header_branch
                %149 = sbr.rel (%p147) target = $region47
              $region44: #{autoencoder_forward.8} parent=39 // loop_body
                %v153 = vld [vmem:[%s151] sm:$0xff]
                %154 = vst [vmem:[%s152] sm:$0xff] %v153
                %v155 = vld [vmem:[%s151 + $0x10] sm:$0xff]
                %156 = vst [vmem:[%s152 + $0x8] sm:$0xff] %v155
                %v157 = vld [vmem:[%s151 + $0x20] sm:$0xff]
                %158 = vst [vmem:[%s152 + $0x10] sm:$0xff] %v157
                %v159 = vld [vmem:[%s151 + $0x30] sm:$0xff]
                %160 = vst [vmem:[%s152 + $0x18] sm:$0xff] %v159
                %v161 = vld [vmem:[%s151 + $0x40] sm:$0xff]
                %162 = vst [vmem:[%s152 + $0x20] sm:$0xff] %v161
              $region45: #{autoencoder_forward.8} parent=39 // loop_footer
                %s150 = sadd.s32 1, %s146
              $region46: #{autoencoder_forward.8} parent=39 // loop_footer_branch
                %145 = sbr.rel target = $region42
              $region47: #{autoencoder_forward.8} parent=39 // loop_exit
                _
            $region40: #{autoencoder_forward.8} parent=31 // pred_fallthru
              _
          $region32: #{autoencoder_forward.8} parent=27 // pred_fallthru
            _
          %185 = vnop
        $region28: #{autoencoder_forward.8} parent=23 // pred_fallthru
          _
      $region24: #{autoencoder_forward.8} parent=5 // pred_fallthru
        _
      %p186 = scmp.le.s32.totalorder 1, %s9
      %p187 = scmp.lt.s32.totalorder %s9, 3
      %p188 = pnand %p186, %p187
      %p189 = pneg %p188
      // Predicated region
      $region63: #{autoencoder_forward.8} parent=5 // pred_check
        _
      $region64: #{autoencoder_forward.8} parent=5 // pred_check_branch
        %191 = sbr.rel (%p188) target = $region66
      $region65: #{autoencoder_forward.8} parent=5 // pred_region
        %s192 = ssub.s32 %s9, 1
        %s193 = sand.u32 %s22, 1
        %s194 = sand.u32 %s22, 1
        %s195 = smul.addr %s194, 40
        %s196 = scalar_lea.vmem [#allocation2], %s195
        // Predicated region
        $region67: #{autoencoder_forward.8} parent=65 // pred_check
          %p197 = pneg %p35
        $region68: #{autoencoder_forward.8} parent=65 // pred_check_branch
          %199 = sbr.rel (%p197) target = $region70
        $region69: #{autoencoder_forward.8} parent=65 // pred_region
          _
        $region70: #{autoencoder_forward.8} parent=65 // pred_fallthru
          _
        %s200 = sand.u32 %s22, 1
        %s201 = sand.u32 %s22, 1
        %s202 = smul.addr %s201, 40
        %s203 = scalar_lea.vmem [#allocation2], %s202
        %p204 = pneg %p35
        %p205 = pneg %p32
        %p206 = pneg %p56
        %p207 = pneg %p53
        %p208 = pneg %p77
        %p209 = pneg %p74
        %p210 = pneg %p103
        %p211 = pneg %p100
        %s212 = smul.u32 2, %s14
        %p213 = scmp.lt.s32.totalorder %s212, 3
        %s214 = scalar_select %p213, %s212, 3
        %s215 = smul.addr %s214, 4
        %s216 = scalar_lea.vmem %s3, %s215
        %s217 = smul.u32 2, %s14
        %s218 = smul.u32 2, %s14
        %p219 = scmp.lt.s32.totalorder %s218, 3
        %s220 = scalar_select %p219, %s218, 3
        %s221 = smul.addr %s220, 4
        %s222 = scalar_lea.vmem %s3, %s221
        %s223 = smul.u32 2, %s14
        %v225 = vld [vmem:[%s1] sm:$0xf]
        %v226 = vld [vmem:[%s196] sm:$0xff]
        %v227 = vld [vmem:[%s196 + $0x8] sm:$0xff]
        %v228 = vld [vmem:[%s196 + $0x10] sm:$0xff]
        %v229 = vld [vmem:[%s196 + $0x18] sm:$0xff]
        %v230 = vld [vmem:[%s196 + $0x20] sm:$0x33]
        %v231 = vld [vmem:[%s2] sm:$0xff]
        %233 = vset.pattern.permute.xlu0 0
        %234 = vperm.xlu0 %233, %v231
        %v235 = vpop.permute.xlu0 %234
        %v242 = vunpack.c.l.b16 %v226
        %v243 = vunpack.c.h.b16 %v226
        %v244 = vunpack.c.l.b16 %v227
        %v245 = vunpack.c.h.b16 %v227
        %v246 = vunpack.c.l.b16 %v228
        %v247 = vunpack.c.h.b16 %v228
        %v248 = vunpack.c.l.b16 %v229
        %v249 = vunpack.c.h.b16 %v229
        %v250 = vunpack.c.l.b16 %v230
        %v251 = vunpack.c.h.b16 %v230
        %v252 = vpack.c.b16 %v244, %v242
        %v253 = vpack.c.b16 %v245, %v243
        %v254 = vpack.c.b16 %v248, %v246
        %v255 = vpack.c.b16 %v249, %v247
        %v256 = vpack.c.b16 %v250, %v250
        %v257 = vpack.c.b16 %v251, %v251
        %vm262 = vcmask 293888
        %v264 = vsel %vm262, %v225, 0
        %vm266 = vcmask 1041408
        %v268 = vsel %vm266, %v256, 0
        %v271 = vsel %vm266, %v257, 0
        %273 = vmatprep.subr.bf16.mxu0 %v253
        %274 = vmatpush1.bf16.msra.mxu0 %v252
        %275 = vmatprep.subr.bf16.mxu0 %v255
        %276 = vmatpush1.bf16.msra.mxu0 %v254
        %277 = vmatprep.subr.bf16.mxu0 %v271
        %278 = vmatpush1.bf16.msra.mxu0 %v268
        %279 = vmatprep.subr.bf16.mxu0 0
        %280 = vmatpush1.bf16.msra.mxu0 0
        %281 = vmatprep.subr.bf16.mxu0 0
        %282 = vmatpush1.bf16.msra.mxu0 0
        %283 = vmatprep.subr.bf16.mxu0 0
        %284 = vmatpush1.bf16.msra.mxu0 0
        %285 = vmatprep.subr.bf16.mxu0 0
        %286 = vmatpush1.bf16.msra.mxu0 0
        %287 = vmatprep.subr.bf16.mxu0 0
        %288 = vmatpush1.bf16.msra.mxu0 0
        %289 = vmatprep.subr.bf16.mxu0 0
        %290 = vmatpush1.bf16.msra.mxu0 0
        %291 = vmatprep.subr.bf16.mxu0 0
        %292 = vmatpush1.bf16.msra.mxu0 0
        %293 = vmatprep.subr.bf16.mxu0 0
        %294 = vmatpush1.bf16.msra.mxu0 0
        %295 = vmatprep.subr.bf16.mxu0 0
        %296 = vmatpush1.bf16.msra.mxu0 0
        %297 = vmatprep.subr.bf16.mxu0 0
        %298 = vmatpush1.bf16.msra.mxu0 0
        %299 = vmatprep.subr.bf16.mxu0 0
        %300 = vmatpush1.bf16.msra.mxu0 0
        %301 = vmatprep.subr.bf16.mxu0 0
        %302 = vmatpush1.bf16.msra.mxu0 0
        %303 = vmatprep.subr.bf16.mxu0 0
        %304 = vmatpush1.bf16.msra.mxu0 0
        %305 = vmatprep.mubr.bf16.mxu0 0
        %306 = vmatmul.mubr.bf16.gmra.mrb[0].mxu0 %v264
        %v307 = vpop.f32.mrb[0].mxu0
        %v308 = vadd.f32 %v235, %v307
        %v309 = vpop.f32.mrb[0].mxu0
        %v310 = vadd.f32 %v235, %v309
        %v311 = vpop.f32.mrb[0].mxu0
        %v312 = vpop.f32.mrb[0].mxu0
        %313 = vdwg.mxu0
        %v314 = vmax.f32 %v308, 0.0
        %v315 = vmax.f32 %v310, 0.0
        %v316 = vpack.c.bf16 %v314, %v314
        %v317 = vpack.c.bf16 %v315, %v315
        %v320 = vunpack.c.l.b16 %v316
        %v321 = vunpack.c.l.b16 %v317
        %v322 = vpack.c.b16 %v321, %v320
        %324 = vst [vmem:[%s222] sm:$0xff] %v322
        %s325 = smul.u32 2, %s14
        %p326 = scmp.lt.s32.totalorder %s325, 3
        %s327 = scalar_select %p326, %s325, 3
        %s328 = smul.addr %s327, 4
        %s329 = scalar_lea.vmem %s3, %s328
        // Predicated region
        $region71: #{autoencoder_forward.8} parent=65 // pred_check
          %p330 = pneg %p100
        $region72: #{autoencoder_forward.8} parent=65 // pred_check_branch
          %332 = sbr.rel (%p330) target = $region74
        $region73: #{autoencoder_forward.8} parent=65 // pred_region
          %s333 = smul.u32 2, %s14
        $region74: #{autoencoder_forward.8} parent=65 // pred_fallthru
          _
      $region66: #{autoencoder_forward.8} parent=5 // pred_fallthru
        _
      %p334 = scmp.le.s32.totalorder 2, %s9
      // Predicated region
      $region75: #{autoencoder_forward.8} parent=5 // pred_check
        %p335 = pneg %p334
      $region76: #{autoencoder_forward.8} parent=5 // pred_check_branch
        %337 = sbr.rel (%p335) target = $region78
      $region77: #{autoencoder_forward.8} parent=5 // pred_region
        %s338 = ssub.s32 %s9, 2
        // Predicated region
        $region79: #{autoencoder_forward.8} parent=77 // pred_check
          %p339 = pneg %p106
        $region80: #{autoencoder_forward.8} parent=77 // pred_check_branch
          %341 = sbr.rel (%p339) target = $region82
        $region81: #{autoencoder_forward.8} parent=77 // pred_region
          %s342 = smul.u32 2, %s15
          %p343 = scmp.lt.s32.totalorder %s342, 3
          %s344 = scalar_select %p343, %s342, 3
          %s345 = smul.addr %s344, 4
          %s346 = scalar_lea.vmem %s3, %s345
        $region82: #{autoencoder_forward.8} parent=77 // pred_fallthru
          _
      $region78: #{autoencoder_forward.8} parent=5 // pred_fallthru
        _
    $region6: #{autoencoder_forward.8} parent=1 // loop_footer
      %s13 = sadd.s32 1, %s9
    $region7: #{autoencoder_forward.8} parent=1 // loop_footer_branch
      %8 = sbr.rel target = $region3
    $region8: #{autoencoder_forward.8} parent=1 // loop_exit
      _

// kernel: autoencoder_forward.9
$region0: #{autoencoder_forward.9}
  #allocation0 [shape = 'u32[]', space=smem, size = 0x4, offset = 0x4, fixed_abs, tag = 'smem constant byte address 0x4 - core index']
  #allocation1 [shape = 'u32[144,128]{1,0:T(1,128)}', space=vmem, size = 0x12000, scoped, tag = 'internal scratch']
  %s0 = inlined_call_operand.vmem [shape: bf16[72,128], index: 0, kind: input, shape index: {}]
  %s1 = inlined_call_operand.vmem [shape: bf16[8,72], index: 1, kind: input, shape index: {}]
  %s2 = inlined_call_operand.vmem [shape: f32[8,1], index: 2, kind: input, shape index: {}]
  %s3 = inlined_call_operand.vmem [shape: bf16[8,128], index: 3, kind: output, shape index: {}]
  %s4 = sld [smem:[#allocation0]]
  $region22: #{autoencoder_forward.9} parent=0
    _
  %s6 = ssub.s32 1, %s4
  %s7 = scalar_select 0, %s6, %s4
  // Predicated region
  $region2: #{autoencoder_forward.9} parent=0 // pred_check
    _
  $region3: #{autoencoder_forward.9} parent=0 // pred_check_branch
    %9 = sbr.rel (0) target = $region5
  $region4: #{autoencoder_forward.9} parent=0 // pred_region
    _
  $region5: #{autoencoder_forward.9} parent=0 // pred_fallthru
    _
  // Predicated region
  $region6: #{autoencoder_forward.9} parent=0 // pred_check
    _
  $region7: #{autoencoder_forward.9} parent=0 // pred_check_branch
    %11 = sbr.rel (0) target = $region9
  $region8: #{autoencoder_forward.9} parent=0 // pred_region
    _
  $region9: #{autoencoder_forward.9} parent=0 // pred_fallthru
    _
  // Predicated region
  $region10: #{autoencoder_forward.9} parent=0 // pred_check
    _
  $region11: #{autoencoder_forward.9} parent=0 // pred_check_branch
    %13 = sbr.rel (0) target = $region13
  $region12: #{autoencoder_forward.9} parent=0 // pred_region
    _
  $region13: #{autoencoder_forward.9} parent=0 // pred_fallthru
    _
  %v15 = vld [vmem:[%s1] sm:$0xf]
  %v16 = vld [vmem:[%s0] sm:$0xf]
  %v17 = vld [vmem:[%s0 + $0x4] sm:$0xf]
  %v18 = vld [vmem:[%s0 + $0x8] sm:$0xf]
  %v19 = vld [vmem:[%s0 + $0xc] sm:$0xf]
  %v20 = vld [vmem:[%s0 + $0x10] sm:$0xf]
  %v21 = vld [vmem:[%s0 + $0x14] sm:$0xf]
  %v22 = vld [vmem:[%s0 + $0x18] sm:$0xf]
  %v23 = vld [vmem:[%s0 + $0x1c] sm:$0xf]
  %v24 = vld [vmem:[%s0 + $0x20] sm:$0xf]
  %v25 = vld [vmem:[%s2] sm:$0xff]
  %27 = vset.pattern.permute.xlu0 0
  %28 = vperm.xlu0 %27, %v25
  %v29 = vpop.permute.xlu0 %28
  %v40 = vunpack.c.l.b16 %v16
  %v41 = vunpack.c.l.b16 %v17
  %v42 = vunpack.c.l.b16 %v18
  %v43 = vunpack.c.l.b16 %v19
  %v44 = vunpack.c.l.b16 %v20
  %v45 = vunpack.c.l.b16 %v21
  %v46 = vunpack.c.l.b16 %v22
  %v47 = vunpack.c.l.b16 %v23
  %v48 = vunpack.c.l.b16 %v24
  %v49 = vpack.c.b16 %v41, %v40
  %v50 = vpack.c.b16 %v43, %v42
  %v51 = vpack.c.b16 %v45, %v44
  %v52 = vpack.c.b16 %v47, %v46
  %v53 = vpack.c.b16 %v48, %v48
  %vm58 = vcmask 588800
  %v60 = vsel %vm58, %v15, 0
  %vm62 = vcmask 1043456
  %v64 = vsel %vm62, %v53, 0
  %66 = vmatprep.subr.bf16.mxu0 0
  %67 = vmatpush1.bf16.msra.mxu0 %v49
  %68 = vmatprep.subr.bf16.mxu0 0
  %69 = vmatpush1.bf16.msra.mxu0 %v50
  %70 = vmatprep.subr.bf16.mxu0 0
  %71 = vmatpush1.bf16.msra.mxu0 %v51
  %72 = vmatprep.subr.bf16.mxu0 0
  %73 = vmatpush1.bf16.msra.mxu0 %v52
  %74 = vmatprep.subr.bf16.mxu0 0
  %75 = vmatpush1.bf16.msra.mxu0 %v64
  %76 = vmatprep.subr.bf16.mxu0 0
  %77 = vmatpush1.bf16.msra.mxu0 0
  %78 = vmatprep.subr.bf16.mxu0 0
  %79 = vmatpush1.bf16.msra.mxu0 0
  %80 = vmatprep.subr.bf16.mxu0 0
  %81 = vmatpush1.bf16.msra.mxu0 0
  %82 = vmatprep.subr.bf16.mxu0 0
  %83 = vmatpush1.bf16.msra.mxu0 0
  %84 = vmatprep.subr.bf16.mxu0 0
  %85 = vmatpush1.bf16.msra.mxu0 0
  %86 = vmatprep.subr.bf16.mxu0 0
  %87 = vmatpush1.bf16.msra.mxu0 0
  %88 = vmatprep.subr.bf16.mxu0 0
  %89 = vmatpush1.bf16.msra.mxu0 0
  %90 = vmatprep.subr.bf16.mxu0 0
  %91 = vmatpush1.bf16.msra.mxu0 0
  %92 = vmatprep.subr.bf16.mxu0 0
  %93 = vmatpush1.bf16.msra.mxu0 0
  %94 = vmatprep.subr.bf16.mxu0 0
  %95 = vmatpush1.bf16.msra.mxu0 0
  %96 = vmatprep.subr.bf16.mxu0 0
  %97 = vmatpush1.bf16.msra.mxu0 0
  %98 = vmatprep.mubr.bf16.mxu0 0
  %99 = vmatmul.mubr.bf16.gmra.mrb[0].mxu0 %v60
  %v100 = vpop.f32.mrb[0].mxu0
  %v101 = vadd.f32 %v29, %v100
  %v102 = vpop.f32.mrb[0].mxu0
  %v103 = vpop.f32.mrb[0].mxu0
  %v104 = vpop.f32.mrb[0].mxu0
  %105 = vdwg.mxu0
  %v106 = vmax.f32 %v101, 0.0
  %v107 = vpack.c.bf16 %v106, %v106
  %108 = vst [vmem:[%s3] sm:$0xf] %v107
  // Predicated region
  $region14: #{autoencoder_forward.9} parent=0 // pred_check
    _
  $region15: #{autoencoder_forward.9} parent=0 // pred_check_branch
    %110 = sbr.rel (0) target = $region17
  $region16: #{autoencoder_forward.9} parent=0 // pred_region
    _
  $region17: #{autoencoder_forward.9} parent=0 // pred_fallthru
    _
  // Predicated region
  $region18: #{autoencoder_forward.9} parent=0 // pred_check
    _
  $region19: #{autoencoder_forward.9} parent=0 // pred_check_branch
    %112 = sbr.rel (0) target = $region21
  $region20: #{autoencoder_forward.9} parent=0 // pred_region
    _
  $region21: #{autoencoder_forward.9} parent=0 // pred_fallthru
    _

// kernel: autoencoder_forward.10
$region0: #{autoencoder_forward.10}
  #allocation0 [shape = 'u32[]', space=smem, size = 0x4, offset = 0x4, fixed_abs, tag = 'smem constant byte address 0x4 - core index']
  #allocation1 [shape = 'u32[144,128]{1,0:T(1,128)}', space=vmem, size = 0x12000, scoped, tag = 'internal scratch']
  %s0 = inlined_call_operand.vmem [shape: bf16[72,128], index: 0, kind: input, shape index: {}]
  %s1 = inlined_call_operand.vmem [shape: bf16[16,72], index: 1, kind: input, shape index: {}]
  %s2 = inlined_call_operand.vmem [shape: f32[16,1], index: 2, kind: input, shape index: {}]
  %s3 = inlined_call_operand.vmem [shape: bf16[16,128], index: 3, kind: output, shape index: {}]
  %s4 = sld [smem:[#allocation0]]
  $region22: #{autoencoder_forward.10} parent=0
    _
  %s6 = ssub.s32 1, %s4
  %s7 = scalar_select 0, %s6, %s4
  // Predicated region
  $region2: #{autoencoder_forward.10} parent=0 // pred_check
    _
  $region3: #{autoencoder_forward.10} parent=0 // pred_check_branch
    %9 = sbr.rel (0) target = $region5
  $region4: #{autoencoder_forward.10} parent=0 // pred_region
    _
  $region5: #{autoencoder_forward.10} parent=0 // pred_fallthru
    _
  // Predicated region
  $region6: #{autoencoder_forward.10} parent=0 // pred_check
    _
  $region7: #{autoencoder_forward.10} parent=0 // pred_check_branch
    %11 = sbr.rel (0) target = $region9
  $region8: #{autoencoder_forward.10} parent=0 // pred_region
    _
  $region9: #{autoencoder_forward.10} parent=0 // pred_fallthru
    _
  // Predicated region
  $region10: #{autoencoder_forward.10} parent=0 // pred_check
    _
  $region11: #{autoencoder_forward.10} parent=0 // pred_check_branch
    %13 = sbr.rel (0) target = $region13
  $region12: #{autoencoder_forward.10} parent=0 // pred_region
    _
  $region13: #{autoencoder_forward.10} parent=0 // pred_fallthru
    _
  %v15 = vld [vmem:[%s1] sm:$0xf]
  %v16 = vld [vmem:[%s1 + $0x4] sm:$0xf]
  %v17 = vld [vmem:[%s0] sm:$0xf]
  %v18 = vld [vmem:[%s0 + $0x4] sm:$0xf]
  %v19 = vld [vmem:[%s0 + $0x8] sm:$0xf]
  %v20 = vld [vmem:[%s0 + $0xc] sm:$0xf]
  %v21 = vld [vmem:[%s0 + $0x10] sm:$0xf]
  %v22 = vld [vmem:[%s0 + $0x14] sm:$0xf]
  %v23 = vld [vmem:[%s0 + $0x18] sm:$0xf]
  %v24 = vld [vmem:[%s0 + $0x1c] sm:$0xf]
  %v25 = vld [vmem:[%s0 + $0x20] sm:$0xf]
  %v26 = vld [vmem:[%s2] sm:$0xff]
  %v27 = vld [vmem:[%s2 + $0x8] sm:$0xff]
  %29 = vset.pattern.permute.xlu0 0
  %30 = vperm.xlu0 %29, %v26
  %v31 = vpop.permute.xlu0 %30
  %34 = vset.pattern.permute.xlu0 0
  %35 = vperm.xlu0 %34, %v27
  %v36 = vpop.permute.xlu0 %35
  %v40 = vunpack.c.l.b16 %v15
  %v41 = vunpack.c.l.b16 %v16
  %v42 = vpack.c.b16 %v41, %v40
  %v52 = vunpack.c.l.b16 %v17
  %v53 = vunpack.c.l.b16 %v18
  %v54 = vunpack.c.l.b16 %v19
  %v55 = vunpack.c.l.b16 %v20
  %v56 = vunpack.c.l.b16 %v21
  %v57 = vunpack.c.l.b16 %v22
  %v58 = vunpack.c.l.b16 %v23
  %v59 = vunpack.c.l.b16 %v24
  %v60 = vunpack.c.l.b16 %v25
  %v61 = vpack.c.b16 %v53, %v52
  %v62 = vpack.c.b16 %v55, %v54
  %v63 = vpack.c.b16 %v57, %v56
  %v64 = vpack.c.b16 %v59, %v58
  %v65 = vpack.c.b16 %v60, %v60
  %vm70 = vcmask 588800
  %v72 = vsel %vm70, %v42, 0
  %vm74 = vcmask 1043456
  %v76 = vsel %vm74, %v65, 0
  %78 = vmatprep.subr.bf16.mxu0 0
  %79 = vmatpush1.bf16.msra.mxu0 %v61
  %80 = vmatprep.subr.bf16.mxu0 0
  %81 = vmatpush1.bf16.msra.mxu0 %v62
  %82 = vmatprep.subr.bf16.mxu0 0
  %83 = vmatpush1.bf16.msra.mxu0 %v63
  %84 = vmatprep.subr.bf16.mxu0 0
  %85 = vmatpush1.bf16.msra.mxu0 %v64
  %86 = vmatprep.subr.bf16.mxu0 0
  %87 = vmatpush1.bf16.msra.mxu0 %v76
  %88 = vmatprep.subr.bf16.mxu0 0
  %89 = vmatpush1.bf16.msra.mxu0 0
  %90 = vmatprep.subr.bf16.mxu0 0
  %91 = vmatpush1.bf16.msra.mxu0 0
  %92 = vmatprep.subr.bf16.mxu0 0
  %93 = vmatpush1.bf16.msra.mxu0 0
  %94 = vmatprep.subr.bf16.mxu0 0
  %95 = vmatpush1.bf16.msra.mxu0 0
  %96 = vmatprep.subr.bf16.mxu0 0
  %97 = vmatpush1.bf16.msra.mxu0 0
  %98 = vmatprep.subr.bf16.mxu0 0
  %99 = vmatpush1.bf16.msra.mxu0 0
  %100 = vmatprep.subr.bf16.mxu0 0
  %101 = vmatpush1.bf16.msra.mxu0 0
  %102 = vmatprep.subr.bf16.mxu0 0
  %103 = vmatpush1.bf16.msra.mxu0 0
  %104 = vmatprep.subr.bf16.mxu0 0
  %105 = vmatpush1.bf16.msra.mxu0 0
  %106 = vmatprep.subr.bf16.mxu0 0
  %107 = vmatpush1.bf16.msra.mxu0 0
  %108 = vmatprep.subr.bf16.mxu0 0
  %109 = vmatpush1.bf16.msra.mxu0 0
  %110 = vmatprep.mubr.bf16.mxu0 0
  %111 = vmatmul.mubr.bf16.gmra.mrb[0].mxu0 %v72
  %v112 = vpop.f32.mrb[0].mxu0
  %v113 = vadd.f32 %v31, %v112
  %v114 = vpop.f32.mrb[0].mxu0
  %v115 = vpop.f32.mrb[0].mxu0
  %v116 = vadd.f32 %v36, %v115
  %v117 = vpop.f32.mrb[0].mxu0
  %118 = vdwg.mxu0
  %v119 = vmax.f32 %v113, 0.0
  %v120 = vmax.f32 %v116, 0.0
  %v121 = vpack.c.bf16 %v120, %v119
  %v123 = vunpack.c.l.b16 %v121
  %v124 = vunpack.c.h.b16 %v121
  %v125 = vpack.c.b16 %v123, %v123
  %v126 = vpack.c.b16 %v124, %v124
  %129 = vst [vmem:[%s3] sm:$0xf] %v125
  %130 = vst [vmem:[%s3 + $0x4] sm:$0xf] %v126
  // Predicated region
  $region14: #{autoencoder_forward.10} parent=0 // pred_check
    _
  $region15: #{autoencoder_forward.10} parent=0 // pred_check_branch
    %132 = sbr.rel (0) target = $region17
  $region16: #{autoencoder_forward.10} parent=0 // pred_region
    _
  $region17: #{autoencoder_forward.10} parent=0 // pred_fallthru
    _
  // Predicated region
  $region18: #{autoencoder_forward.10} parent=0 // pred_check
    _
  $region19: #{autoencoder_forward.10} parent=0 // pred_check_branch
    %134 = sbr.rel (0) target = $region21
  $region20: #{autoencoder_forward.10} parent=0 // pred_region
    _
  $region21: #{autoencoder_forward.10} parent=0 // pred_fallthru
    _

// kernel: autoencoder_forward.11
$region0: #{autoencoder_forward.11}
  #allocation0 [shape = 'u32[]', space=smem, size = 0x4, offset = 0x4, fixed_abs, tag = 'smem constant byte address 0x4 - core index']
  #allocation1 [shape = 'u32[144,128]{1,0:T(1,128)}', space=vmem, size = 0x12000, scoped, tag = 'internal scratch']
  %s0 = inlined_call_operand.vmem [shape: bf16[144,128], index: 0, kind: input, shape index: {}]
  %s1 = inlined_call_operand.vmem [shape: bf16[16,144], index: 1, kind: input, shape index: {}]
  %s2 = inlined_call_operand.vmem [shape: f32[16,1], index: 2, kind: input, shape index: {}]
  %s3 = inlined_call_operand.vmem [shape: bf16[16,128], index: 3, kind: output, shape index: {}]
  %s4 = sld [smem:[#allocation0]]
  $region22: #{autoencoder_forward.11} parent=0
    _
  %s6 = ssub.s32 1, %s4
  %s7 = scalar_select 0, %s6, %s4
  // Predicated region
  $region2: #{autoencoder_forward.11} parent=0 // pred_check
    _
  $region3: #{autoencoder_forward.11} parent=0 // pred_check_branch
    %9 = sbr.rel (0) target = $region5
  $region4: #{autoencoder_forward.11} parent=0 // pred_region
    _
  $region5: #{autoencoder_forward.11} parent=0 // pred_fallthru
    _
  // Predicated region
  $region6: #{autoencoder_forward.11} parent=0 // pred_check
    _
  $region7: #{autoencoder_forward.11} parent=0 // pred_check_branch
    %11 = sbr.rel (0) target = $region9
  $region8: #{autoencoder_forward.11} parent=0 // pred_region
    _
  $region9: #{autoencoder_forward.11} parent=0 // pred_fallthru
    _
  // Predicated region
  $region10: #{autoencoder_forward.11} parent=0 // pred_check
    _
  $region11: #{autoencoder_forward.11} parent=0 // pred_check_branch
    %13 = sbr.rel (0) target = $region13
  $region12: #{autoencoder_forward.11} parent=0 // pred_region
    _
  $region13: #{autoencoder_forward.11} parent=0 // pred_fallthru
    _
  %v15 = vld [vmem:[%s1] sm:$0xff]
  %v16 = vld [vmem:[%s1 + $0x8] sm:$0xff]
  %v17 = vld [vmem:[%s0] sm:$0xf]
  %v18 = vld [vmem:[%s0 + $0x4] sm:$0xf]
  %v19 = vld [vmem:[%s0 + $0x8] sm:$0xf]
  %v20 = vld [vmem:[%s0 + $0xc] sm:$0xf]
  %v21 = vld [vmem:[%s0 + $0x10] sm:$0xf]
  %v22 = vld [vmem:[%s0 + $0x14] sm:$0xf]
  %v23 = vld [vmem:[%s0 + $0x18] sm:$0xf]
  %v24 = vld [vmem:[%s0 + $0x1c] sm:$0xf]
  %v25 = vld [vmem:[%s0 + $0x20] sm:$0xf]
  %v26 = vld [vmem:[%s0 + $0x24] sm:$0xf]
  %v27 = vld [vmem:[%s0 + $0x28] sm:$0xf]
  %v28 = vld [vmem:[%s0 + $0x2c] sm:$0xf]
  %v29 = vld [vmem:[%s0 + $0x30] sm:$0xf]
  %v30 = vld [vmem:[%s0 + $0x34] sm:$0xf]
  %v31 = vld [vmem:[%s0 + $0x38] sm:$0xf]
  %v32 = vld [vmem:[%s0 + $0x3c] sm:$0xf]
  %v33 = vld [vmem:[%s0 + $0x40] sm:$0xf]
  %v34 = vld [vmem:[%s0 + $0x44] sm:$0xf]
  %v35 = vld [vmem:[%s2] sm:$0xff]
  %v36 = vld [vmem:[%s2 + $0x8] sm:$0xff]
  %38 = vset.pattern.permute.xlu0 0
  %39 = vperm.xlu0 %38, %v35
  %v40 = vpop.permute.xlu0 %39
  %43 = vset.pattern.permute.xlu0 0
  %44 = vperm.xlu0 %43, %v36
  %v45 = vpop.permute.xlu0 %44
  %v49 = vunpack.c.l.b16 %v15
  %v50 = vunpack.c.h.b16 %v15
  %v51 = vunpack.c.l.b16 %v16
  %v52 = vunpack.c.h.b16 %v16
  %v53 = vpack.c.b16 %v51, %v49
  %v54 = vpack.c.b16 %v52, %v50
  %v74 = vunpack.c.l.b16 %v17
  %v75 = vunpack.c.l.b16 %v18
  %v76 = vunpack.c.l.b16 %v19
  %v77 = vunpack.c.l.b16 %v20
  %v78 = vunpack.c.l.b16 %v21
  %v79 = vunpack.c.l.b16 %v22
  %v80 = vunpack.c.l.b16 %v23
  %v81 = vunpack.c.l.b16 %v24
  %v82 = vunpack.c.l.b16 %v25
  %v83 = vunpack.c.l.b16 %v26
  %v84 = vunpack.c.l.b16 %v27
  %v85 = vunpack.c.l.b16 %v28
  %v86 = vunpack.c.l.b16 %v29
  %v87 = vunpack.c.l.b16 %v30
  %v88 = vunpack.c.l.b16 %v31
  %v89 = vunpack.c.l.b16 %v32
  %v90 = vunpack.c.l.b16 %v33
  %v91 = vunpack.c.l.b16 %v34
  %v92 = vpack.c.b16 %v75, %v74
  %v93 = vpack.c.b16 %v77, %v76
  %v94 = vpack.c.b16 %v79, %v78
  %v95 = vpack.c.b16 %v81, %v80
  %v96 = vpack.c.b16 %v83, %v82
  %v97 = vpack.c.b16 %v85, %v84
  %v98 = vpack.c.b16 %v87, %v86
  %v99 = vpack.c.b16 %v89, %v88
  %v100 = vpack.c.b16 %v91, %v90
  %vm110 = vcmask 130048
  %v112 = vsel %vm110, %v54, 0
  %114 = vmatprep.subr.bf16.mxu0 0
  %115 = vmatpush1.bf16.msra.mxu0 %v92
  %116 = vmatprep.subr.bf16.mxu0 0
  %117 = vmatpush1.bf16.msra.mxu0 %v93
  %118 = vmatprep.subr.bf16.mxu0 0
  %119 = vmatpush1.bf16.msra.mxu0 %v94
  %120 = vmatprep.subr.bf16.mxu0 0
  %121 = vmatpush1.bf16.msra.mxu0 %v95
  %122 = vmatprep.subr.bf16.mxu0 0
  %123 = vmatpush1.bf16.msra.mxu0 %v96
  %124 = vmatprep.subr.bf16.mxu0 0
  %125 = vmatpush1.bf16.msra.mxu0 %v97
  %126 = vmatprep.subr.bf16.mxu0 0
  %127 = vmatpush1.bf16.msra.mxu0 %v98
  %128 = vmatprep.subr.bf16.mxu0 0
  %129 = vmatpush1.bf16.msra.mxu0 %v99
  %130 = vmatprep.subr.bf16.mxu0 0
  %131 = vmatpush1.bf16.msra.mxu0 %v100
  %132 = vmatprep.subr.bf16.mxu0 0
  %133 = vmatpush1.bf16.msra.mxu0 0
  %134 = vmatprep.subr.bf16.mxu0 0
  %135 = vmatpush1.bf16.msra.mxu0 0
  %136 = vmatprep.subr.bf16.mxu0 0
  %137 = vmatpush1.bf16.msra.mxu0 0
  %138 = vmatprep.subr.bf16.mxu0 0
  %139 = vmatpush1.bf16.msra.mxu0 0
  %140 = vmatprep.subr.bf16.mxu0 0
  %141 = vmatpush1.bf16.msra.mxu0 0
  %142 = vmatprep.subr.bf16.mxu0 0
  %143 = vmatpush1.bf16.msra.mxu0 0
  %144 = vmatprep.subr.bf16.mxu0 0
  %145 = vmatpush1.bf16.msra.mxu0 0
  %146 = vmatprep.mubr.bf16.mxu0 %v112
  %147 = vmatmul.mubr.bf16.gmra.mrb[0].mxu0 %v53
  %v148 = vpop.f32.mrb[0].mxu0
  %v149 = vadd.f32 %v40, %v148
  %v150 = vpop.f32.mrb[0].mxu0
  %v151 = vpop.f32.mrb[0].mxu0
  %v152 = vadd.f32 %v45, %v151
  %v153 = vpop.f32.mrb[0].mxu0
  %154 = vdwg.mxu0
  %v155 = vmax.f32 %v149, 0.0
  %v156 = vmax.f32 %v152, 0.0
  %v157 = vpack.c.bf16 %v156, %v155
  %v159 = vunpack.c.l.b16 %v157
  %v160 = vunpack.c.h.b16 %v157
  %v161 = vpack.c.b16 %v159, %v159
  %v162 = vpack.c.b16 %v160, %v160
  %165 = vst [vmem:[%s3] sm:$0xf] %v161
  %166 = vst [vmem:[%s3 + $0x4] sm:$0xf] %v162
  // Predicated region
  $region14: #{autoencoder_forward.11} parent=0 // pred_check
    _
  $region15: #{autoencoder_forward.11} parent=0 // pred_check_branch
    %168 = sbr.rel (0) target = $region17
  $region16: #{autoencoder_forward.11} parent=0 // pred_region
    _
  $region17: #{autoencoder_forward.11} parent=0 // pred_fallthru
    _
  // Predicated region
  $region18: #{autoencoder_forward.11} parent=0 // pred_check
    _
  $region19: #{autoencoder_forward.11} parent=0 // pred_check_branch
    %170 = sbr.rel (0) target = $region21
  $region20: #{autoencoder_forward.11} parent=0 // pred_region
    _
  $region21: #{autoencoder_forward.11} parent=0 // pred_fallthru
    _

// kernel: autoencoder_forward.13
$region0: #{autoencoder_forward.13}
  #allocation0 [shape = 'u32[]', space=smem, size = 0x4, offset = 0x4, fixed_abs, tag = 'smem constant byte address 0x4 - core index']
  #allocation1 [shape = 'u32[144,128]{1,0:T(1,128)}', space=vmem, size = 0x12000, scoped, tag = 'internal scratch']
  %s0 = inlined_call_operand.vmem [shape: bf16[144,128], index: 0, kind: input, shape index: {}]
  %s1 = inlined_call_operand.vmem [shape: bf16[8,144], index: 1, kind: input, shape index: {}]
  %s2 = inlined_call_operand.vmem [shape: f32[8,1], index: 2, kind: input, shape index: {}]
  %s3 = inlined_call_operand.vmem [shape: f32[8,1], index: 3, kind: input, shape index: {}]
  %s4 = inlined_call_operand.vmem [shape: bf16[8,128], index: 4, kind: input, shape index: {}]
  %s5 = inlined_call_operand.vmem [shape: bf16[8,128], index: 5, kind: output, shape index: {}]
  %s6 = sld [smem:[#allocation0]]
  $region30: #{autoencoder_forward.13} parent=0
    _
  %s8 = ssub.s32 1, %s6
  %s9 = scalar_select 0, %s8, %s6
  // Predicated region
  $region2: #{autoencoder_forward.13} parent=0 // pred_check
    _
  $region3: #{autoencoder_forward.13} parent=0 // pred_check_branch
    %11 = sbr.rel (0) target = $region5
  $region4: #{autoencoder_forward.13} parent=0 // pred_region
    _
  $region5: #{autoencoder_forward.13} parent=0 // pred_fallthru
    _
  // Predicated region
  $region6: #{autoencoder_forward.13} parent=0 // pred_check
    _
  $region7: #{autoencoder_forward.13} parent=0 // pred_check_branch
    %13 = sbr.rel (0) target = $region9
  $region8: #{autoencoder_forward.13} parent=0 // pred_region
    _
  $region9: #{autoencoder_forward.13} parent=0 // pred_fallthru
    _
  // Predicated region
  $region10: #{autoencoder_forward.13} parent=0 // pred_check
    _
  $region11: #{autoencoder_forward.13} parent=0 // pred_check_branch
    %15 = sbr.rel (0) target = $region13
  $region12: #{autoencoder_forward.13} parent=0 // pred_region
    _
  $region13: #{autoencoder_forward.13} parent=0 // pred_fallthru
    _
  // Predicated region
  $region14: #{autoencoder_forward.13} parent=0 // pred_check
    _
  $region15: #{autoencoder_forward.13} parent=0 // pred_check_branch
    %17 = sbr.rel (0) target = $region17
  $region16: #{autoencoder_forward.13} parent=0 // pred_region
    _
  $region17: #{autoencoder_forward.13} parent=0 // pred_fallthru
    _
  // Predicated region
  $region18: #{autoencoder_forward.13} parent=0 // pred_check
    _
  $region19: #{autoencoder_forward.13} parent=0 // pred_check_branch
    %19 = sbr.rel (0) target = $region21
  $region20: #{autoencoder_forward.13} parent=0 // pred_region
    _
  $region21: #{autoencoder_forward.13} parent=0 // pred_fallthru
    _
  %v21 = vld [vmem:[%s1] sm:$0xff]
  %v22 = vld [vmem:[%s0] sm:$0xf]
  %v23 = vld [vmem:[%s0 + $0x4] sm:$0xf]
  %v24 = vld [vmem:[%s0 + $0x8] sm:$0xf]
  %v25 = vld [vmem:[%s0 + $0xc] sm:$0xf]
  %v26 = vld [vmem:[%s0 + $0x10] sm:$0xf]
  %v27 = vld [vmem:[%s0 + $0x14] sm:$0xf]
  %v28 = vld [vmem:[%s0 + $0x18] sm:$0xf]
  %v29 = vld [vmem:[%s0 + $0x1c] sm:$0xf]
  %v30 = vld [vmem:[%s0 + $0x20] sm:$0xf]
  %v31 = vld [vmem:[%s0 + $0x24] sm:$0xf]
  %v32 = vld [vmem:[%s0 + $0x28] sm:$0xf]
  %v33 = vld [vmem:[%s0 + $0x2c] sm:$0xf]
  %v34 = vld [vmem:[%s0 + $0x30] sm:$0xf]
  %v35 = vld [vmem:[%s0 + $0x34] sm:$0xf]
  %v36 = vld [vmem:[%s0 + $0x38] sm:$0xf]
  %v37 = vld [vmem:[%s0 + $0x3c] sm:$0xf]
  %v38 = vld [vmem:[%s0 + $0x40] sm:$0xf]
  %v39 = vld [vmem:[%s0 + $0x44] sm:$0xf]
  %v40 = vld [vmem:[%s2] sm:$0xff]
  %42 = vset.pattern.permute.xlu0 0
  %43 = vperm.xlu0 %42, %v40
  %v44 = vpop.permute.xlu0 %43
  %v47 = vunpack.c.l.b16 %v21
  %v48 = vunpack.c.h.b16 %v21
  %v49 = vpack.c.b16 %v47, %v47
  %v50 = vpack.c.b16 %v48, %v48
  %v70 = vunpack.c.l.b16 %v22
  %v71 = vunpack.c.l.b16 %v23
  %v72 = vunpack.c.l.b16 %v24
  %v73 = vunpack.c.l.b16 %v25
  %v74 = vunpack.c.l.b16 %v26
  %v75 = vunpack.c.l.b16 %v27
  %v76 = vunpack.c.l.b16 %v28
  %v77 = vunpack.c.l.b16 %v29
  %v78 = vunpack.c.l.b16 %v30
  %v79 = vunpack.c.l.b16 %v31
  %v80 = vunpack.c.l.b16 %v32
  %v81 = vunpack.c.l.b16 %v33
  %v82 = vunpack.c.l.b16 %v34
  %v83 = vunpack.c.l.b16 %v35
  %v84 = vunpack.c.l.b16 %v36
  %v85 = vunpack.c.l.b16 %v37
  %v86 = vunpack.c.l.b16 %v38
  %v87 = vunpack.c.l.b16 %v39
  %v88 = vpack.c.b16 %v71, %v70
  %v89 = vpack.c.b16 %v73, %v72
  %v90 = vpack.c.b16 %v75, %v74
  %v91 = vpack.c.b16 %v77, %v76
  %v92 = vpack.c.b16 %v79, %v78
  %v93 = vpack.c.b16 %v81, %v80
  %v94 = vpack.c.b16 %v83, %v82
  %v95 = vpack.c.b16 %v85, %v84
  %v96 = vpack.c.b16 %v87, %v86
  %vm106 = vcmask 130048
  %v108 = vsel %vm106, %v50, 0
  %110 = vmatprep.subr.bf16.mxu0 0
  %111 = vmatpush1.bf16.msra.mxu0 %v88
  %112 = vmatprep.subr.bf16.mxu0 0
  %113 = vmatpush1.bf16.msra.mxu0 %v89
  %114 = vmatprep.subr.bf16.mxu0 0
  %115 = vmatpush1.bf16.msra.mxu0 %v90
  %116 = vmatprep.subr.bf16.mxu0 0
  %117 = vmatpush1.bf16.msra.mxu0 %v91
  %118 = vmatprep.subr.bf16.mxu0 0
  %119 = vmatpush1.bf16.msra.mxu0 %v92
  %120 = vmatprep.subr.bf16.mxu0 0
  %121 = vmatpush1.bf16.msra.mxu0 %v93
  %122 = vmatprep.subr.bf16.mxu0 0
  %123 = vmatpush1.bf16.msra.mxu0 %v94
  %124 = vmatprep.subr.bf16.mxu0 0
  %125 = vmatpush1.bf16.msra.mxu0 %v95
  %126 = vmatprep.subr.bf16.mxu0 0
  %127 = vmatpush1.bf16.msra.mxu0 %v96
  %128 = vmatprep.subr.bf16.mxu0 0
  %129 = vmatpush1.bf16.msra.mxu0 0
  %130 = vmatprep.subr.bf16.mxu0 0
  %131 = vmatpush1.bf16.msra.mxu0 0
  %132 = vmatprep.subr.bf16.mxu0 0
  %133 = vmatpush1.bf16.msra.mxu0 0
  %134 = vmatprep.subr.bf16.mxu0 0
  %135 = vmatpush1.bf16.msra.mxu0 0
  %136 = vmatprep.subr.bf16.mxu0 0
  %137 = vmatpush1.bf16.msra.mxu0 0
  %138 = vmatprep.subr.bf16.mxu0 0
  %139 = vmatpush1.bf16.msra.mxu0 0
  %140 = vmatprep.subr.bf16.mxu0 0
  %141 = vmatpush1.bf16.msra.mxu0 0
  %142 = vmatprep.mubr.bf16.mxu0 %v108
  %143 = vmatmul.mubr.bf16.gmra.mrb[0].mxu0 %v49
  %v144 = vpop.f32.mrb[0].mxu0
  %v145 = vadd.f32 %v44, %v144
  %v146 = vpop.f32.mrb[0].mxu0
  %v147 = vpop.f32.mrb[0].mxu0
  %v148 = vpop.f32.mrb[0].mxu0
  %149 = vdwg.mxu0
  %v150 = vld [vmem:[%s3] sm:$0xff]
  %v151 = vld [vmem:[%s4] sm:$0xf]
  %v152 = vunpack.c.l.bf16 %v151
  %154 = vset.pattern.permute.xlu0 0
  %155 = vperm.xlu0 %154, %v150
  %v156 = vpop.permute.xlu0 %155
  %v158 = vmul.f32 %v156, %v152
  %v159 = vadd.f32 %v145, %v158
  %v160 = vmax.f32 %v159, 0.0
  %v161 = vpack.c.bf16 %v160, %v160
  %162 = vst [vmem:[%s5] sm:$0xf] %v161
  // Predicated region
  $region22: #{autoencoder_forward.13} parent=0 // pred_check
    _
  $region23: #{autoencoder_forward.13} parent=0 // pred_check_branch
    %164 = sbr.rel (0) target = $region25
  $region24: #{autoencoder_forward.13} parent=0 // pred_region
    _
  $region25: #{autoencoder_forward.13} parent=0 // pred_fallthru
    _
  // Predicated region
  $region26: #{autoencoder_forward.13} parent=0 // pred_check
    _
  $region27: #{autoencoder_forward.13} parent=0 // pred_check_branch
    %166 = sbr.rel (0) target = $region29
  $region28: #{autoencoder_forward.13} parent=0 // pred_region
    _
  $region29: #{autoencoder_forward.13} parent=0 // pred_fallthru
    _

// kernel: autoencoder_forward.14
$region0: #{autoencoder_forward.14}
  #allocation0 [shape = 'u32[]', space=smem, size = 0x4, offset = 0x4, fixed_abs, tag = 'smem constant byte address 0x4 - core index']
  #allocation1 [shape = 'u32[144,128]{1,0:T(1,128)}', space=vmem, size = 0x12000, scoped, tag = 'internal scratch']
  %s0 = inlined_call_operand.vmem [shape: bf16[72,512], index: 0, kind: input, shape index: {}]
  %s1 = inlined_call_operand.vmem [shape: bf16[8,72], index: 1, kind: input, shape index: {}]
  %s2 = inlined_call_operand.vmem [shape: f32[8,1], index: 2, kind: input, shape index: {}]
  %s3 = inlined_call_operand.vmem [shape: bf16[8,512], index: 3, kind: output, shape index: {}]
  %s4 = sld [smem:[#allocation0]]
  $region83: #{autoencoder_forward.14} parent=0
    _
  %s6 = ssub.s32 1, %s4
  %s7 = scalar_select 0, %s6, %s4
  $region1: #{autoencoder_forward.14} parent=0
    #allocation2 [shape = 'u8[73728]{0}', space=vmem, size = 0x12000, scoped, tag = 'input window, operand 0']
    loop: start=0, step=1, limit=4
    $region2: #{autoencoder_forward.14} parent=1 // loop_pre_header
      _
    $region3: #{autoencoder_forward.14} parent=1 // loop_header
      %s9 = sphi 0, %s13
      %p10 = scmp.ge.s32.totalorder %s9, 4
      %s19 = sphi 0, %s21
      %s22 = sphi 0, %s19
      %s23 = sphi 0, %s22
      %s39 = sphi 0, %s23
      %s43 = sphi 0, %s43
      %s45 = sphi 0, %s43
      %s46 = sphi 0, %s45
      %s60 = sphi 0, %s46
      %s64 = sphi 0, %s64
      %s66 = sphi 0, %s64
      %s67 = sphi 0, %s66
      %s81 = sphi 0, %s67
      %s87 = sphi 0, %s89
      %s90 = sphi 0, %s87
      %s91 = sphi 0, %s90
      %s107 = sphi 0, %s91
    $region4: #{autoencoder_forward.14} parent=1 // loop_header_branch
      %12 = sbr.rel (%p10) target = $region8
    $region5: #{autoencoder_forward.14} parent=1 // loop_body
      %s14 = ssub.s32 %s9, 1
      %s15 = ssub.s32 %s9, 2
      %s16 = sadd.s32 %s9, 1
      %s17 = ssub.s32 %s9, %s16
      %p18 = scmp.eq.s32.totalorder %s17, 0
      %s20 = sadd.s32 %s19, 1
      %s21 = scalar_select %p18, %s19, %s20
      %p24 = pneg %p18
      %p25 = scmp.eq.s32.totalorder %s9, 1
      %p26 = por %p24, %p25
      %p27 = scmp.ne.s32.totalorder %s19, %s22
      %p28 = scmp.eq.s32.totalorder %s9, 0
      %p29 = por %p27, %p28
      %p30 = scmp.ne.s32.totalorder %s19, %s22
      %p31 = scmp.eq.s32.totalorder %s14, 1
      %p32 = por %p30, %p31
      %p33 = scmp.ne.s32.totalorder %s22, %s23
      %p34 = scmp.eq.s32.totalorder %s14, 0
      %p35 = por %p33, %p34
      %p36 = scmp.ne.s32.totalorder %s22, %s23
      %p37 = scmp.eq.s32.totalorder %s15, 1
      %p38 = por %p36, %p37
      %p40 = scmp.ne.s32.totalorder %s23, %s39
      %p41 = scmp.eq.s32.totalorder %s15, 0
      %p42 = por %p40, %p41
      %s44 = sadd.s32 %s43, 1
      %p47 = scmp.eq.s32.totalorder %s9, 1
      %p48 = scmp.ne.s32.totalorder %s43, %s45
      %p49 = scmp.eq.s32.totalorder %s9, 0
      %p50 = por %p48, %p49
      %p51 = scmp.ne.s32.totalorder %s43, %s45
      %p52 = scmp.eq.s32.totalorder %s14, 1
      %p53 = por %p51, %p52
      %p54 = scmp.ne.s32.totalorder %s45, %s46
      %p55 = scmp.eq.s32.totalorder %s14, 0
      %p56 = por %p54, %p55
      %p57 = scmp.ne.s32.totalorder %s45, %s46
      %p58 = scmp.eq.s32.totalorder %s15, 1
      %p59 = por %p57, %p58
      %p61 = scmp.ne.s32.totalorder %s46, %s60
      %p62 = scmp.eq.s32.totalorder %s15, 0
      %p63 = por %p61, %p62
      %s65 = sadd.s32 %s64, 1
      %p68 = scmp.eq.s32.totalorder %s9, 1
      %p69 = scmp.ne.s32.totalorder %s64, %s66
      %p70 = scmp.eq.s32.totalorder %s9, 0
      %p71 = por %p69, %p70
      %p72 = scmp.ne.s32.totalorder %s64, %s66
      %p73 = scmp.eq.s32.totalorder %s14, 1
      %p74 = por %p72, %p73
      %p75 = scmp.ne.s32.totalorder %s66, %s67
      %p76 = scmp.eq.s32.totalorder %s14, 0
      %p77 = por %p75, %p76
      %p78 = scmp.ne.s32.totalorder %s66, %s67
      %p79 = scmp.eq.s32.totalorder %s15, 1
      %p80 = por %p78, %p79
      %p82 = scmp.ne.s32.totalorder %s67, %s81
      %p83 = scmp.eq.s32.totalorder %s15, 0
      %p84 = por %p82, %p83
      %s85 = ssub.s32 %s9, %s16
      %p86 = scmp.eq.s32.totalorder %s85, 0
      %s88 = sadd.s32 %s87, 1
      %s89 = scalar_select %p86, %s87, %s88
      %p92 = pneg %p86
      %p93 = scmp.eq.s32.totalorder %s9, 1
      %p94 = por %p92, %p93
      %p95 = scmp.ne.s32.totalorder %s87, %s90
      %p96 = scmp.eq.s32.totalorder %s9, 0
      %p97 = por %p95, %p96
      %p98 = scmp.ne.s32.totalorder %s87, %s90
      %p99 = scmp.eq.s32.totalorder %s14, 1
      %p100 = por %p98, %p99
      %p101 = scmp.ne.s32.totalorder %s90, %s91
      %p102 = scmp.eq.s32.totalorder %s14, 0
      %p103 = por %p101, %p102
      %p104 = scmp.ne.s32.totalorder %s90, %s91
      %p105 = scmp.eq.s32.totalorder %s15, 1
      %p106 = por %p104, %p105
      %p108 = scmp.ne.s32.totalorder %s91, %s107
      %p109 = scmp.eq.s32.totalorder %s15, 0
      %p110 = por %p108, %p109
      %p111 = scmp.le.s32.totalorder 1, %s9
      %p112 = scmp.lt.s32.totalorder %s9, 3
      %p113 = pnand %p111, %p112
      %p114 = pneg %p113
      // Predicated region
      $region9: #{autoencoder_forward.14} parent=5 // pred_check
        _
      $region10: #{autoencoder_forward.14} parent=5 // pred_check_branch
        %116 = sbr.rel (%p113) target = $region12
      $region11: #{autoencoder_forward.14} parent=5 // pred_region
        %s117 = ssub.s32 %s9, 1
        // Predicated region
        $region13: #{autoencoder_forward.14} parent=11 // pred_check
          %p118 = pneg %p56
        $region14: #{autoencoder_forward.14} parent=11 // pred_check_branch
          %120 = sbr.rel (%p118) target = $region16
        $region15: #{autoencoder_forward.14} parent=11 // pred_region
          _
        $region16: #{autoencoder_forward.14} parent=11 // pred_fallthru
          _
        // Predicated region
        $region17: #{autoencoder_forward.14} parent=11 // pred_check
          %p121 = pneg %p77
        $region18: #{autoencoder_forward.14} parent=11 // pred_check_branch
          %123 = sbr.rel (%p121) target = $region20
        $region19: #{autoencoder_forward.14} parent=11 // pred_region
          _
        $region20: #{autoencoder_forward.14} parent=11 // pred_fallthru
          _
      $region12: #{autoencoder_forward.14} parent=5 // pred_fallthru
        _
      %p124 = scmp.lt.s32.totalorder %s9, 2
      // Predicated region
      $region21: #{autoencoder_forward.14} parent=5 // pred_check
        %p125 = pneg %p124
      $region22: #{autoencoder_forward.14} parent=5 // pred_check_branch
        %127 = sbr.rel (%p125) target = $region24
      $region23: #{autoencoder_forward.14} parent=5 // pred_region
        // Predicated region
        $region25: #{autoencoder_forward.14} parent=23 // pred_check
          %p128 = pneg %p29
        $region26: #{autoencoder_forward.14} parent=23 // pred_check_branch
          %130 = sbr.rel (%p128) target = $region28
        $region27: #{autoencoder_forward.14} parent=23 // pred_region
          %s131 = sand.u32 %s19, 1
          %s132 = sand.u32 %s19, 1
          %s133 = smul.addr %s132, 72
          %s134 = scalar_lea.vmem [#allocation2], %s133
          %s135 = smul.u32 2, %s9
          %s136 = smul.addr %s135, 4
          %s137 = scalar_lea.vmem %s0, %s136
          // Predicated region
          $region29: #{autoencoder_forward.14} parent=27 // pred_check
            _
          $region30: #{autoencoder_forward.14} parent=27 // pred_check_branch
            %139 = sbr.rel (0) target = $region32
          $region31: #{autoencoder_forward.14} parent=27 // pred_region
            // Predicated region
            $region33: #{autoencoder_forward.14} parent=31 // pred_check
              _
            $region34: #{autoencoder_forward.14} parent=31 // pred_check_branch
              %141 = sbr.rel (0) target = $region36
            $region35: #{autoencoder_forward.14} parent=31 // pred_region
              // Predicated region
              $region48: #{autoencoder_forward.14} parent=35 // pred_check
                _
              $region49: #{autoencoder_forward.14} parent=35 // pred_check_branch
                %172 = sbr.rel (0) target = $region51
              $region50: #{autoencoder_forward.14} parent=35 // pred_region
                loop: start=0, step=1, limit=1
                $region52: #{autoencoder_forward.14} parent=50 // loop_pre_header
                  _
                $region53: #{autoencoder_forward.14} parent=50 // loop_header
                  %s174 = sphi 0, %s178
                  %p175 = scmp.ge.s32.totalorder %s174, 1
                  %s179 = sphi %s137, %s137
                  %s180 = sphi %s134, %s134
                $region54: #{autoencoder_forward.14} parent=50 // loop_header_branch
                  %177 = sbr.rel (%p175) target = $region58
                $region55: #{autoencoder_forward.14} parent=50 // loop_body
                  %v181 = vld [vmem:[%s179] sm:$0xff]
                  %182 = vst [vmem:[%s180] sm:$0xff] %v181
                  %v183 = vld [vmem:[%s179 + $0x10] sm:$0xff]
                  %184 = vst [vmem:[%s180 + $0x8] sm:$0xff] %v183
                  %v185 = vld [vmem:[%s179 + $0x20] sm:$0xff]
                  %186 = vst [vmem:[%s180 + $0x10] sm:$0xff] %v185
                  %v187 = vld [vmem:[%s179 + $0x30] sm:$0xff]
                  %188 = vst [vmem:[%s180 + $0x18] sm:$0xff] %v187
                  %v189 = vld [vmem:[%s179 + $0x40] sm:$0xff]
                  %190 = vst [vmem:[%s180 + $0x20] sm:$0xff] %v189
                  %v191 = vld [vmem:[%s179 + $0x50] sm:$0xff]
                  %192 = vst [vmem:[%s180 + $0x28] sm:$0xff] %v191
                  %v193 = vld [vmem:[%s179 + $0x60] sm:$0xff]
                  %194 = vst [vmem:[%s180 + $0x30] sm:$0xff] %v193
                  %v195 = vld [vmem:[%s179 + $0x70] sm:$0xff]
                  %196 = vst [vmem:[%s180 + $0x38] sm:$0xff] %v195
                  %v197 = vld [vmem:[%s179 + $0x80] sm:$0xff]
                  %198 = vst [vmem:[%s180 + $0x40] sm:$0xff] %v197
                $region56: #{autoencoder_forward.14} parent=50 // loop_footer
                  %s178 = sadd.s32 1, %s174
                $region57: #{autoencoder_forward.14} parent=50 // loop_footer_branch
                  %173 = sbr.rel target = $region53
                $region58: #{autoencoder_forward.14} parent=50 // loop_exit
                  _
              $region51: #{autoencoder_forward.14} parent=35 // pred_fallthru
                _
              // Predicated region
              $region59: #{autoencoder_forward.14} parent=35 // pred_check
                _
              $region60: #{autoencoder_forward.14} parent=35 // pred_check_branch
                %200 = sbr.rel target = $region62
              $region61: #{autoencoder_forward.14} parent=35 // pred_region
                _
              $region62: #{autoencoder_forward.14} parent=35 // pred_fallthru
                _
            $region36: #{autoencoder_forward.14} parent=31 // pred_fallthru
              _
            // Predicated region
            $region37: #{autoencoder_forward.14} parent=31 // pred_check
              _
            $region38: #{autoencoder_forward.14} parent=31 // pred_check_branch
              %143 = sbr.rel target = $region40
            $region39: #{autoencoder_forward.14} parent=31 // pred_region
              loop: start=0, step=1, limit=1
              $region41: #{autoencoder_forward.14} parent=39 // loop_pre_header
                _
              $region42: #{autoencoder_forward.14} parent=39 // loop_header
                %s146 = sphi 0, %s150
                %p147 = scmp.ge.s32.totalorder %s146, 1
                %s151 = sphi %s137, %s137
                %s152 = sphi %s134, %s134
              $region43: #{autoencoder_forward.14} parent=39 // loop_header_branch
                %149 = sbr.rel (%p147) target = $region47
              $region44: #{autoencoder_forward.14} parent=39 // loop_body
                %v153 = vld [vmem:[%s151] sm:$0xff]
                %154 = vst [vmem:[%s152] sm:$0xff] %v153
                %v155 = vld [vmem:[%s151 + $0x10] sm:$0xff]
                %156 = vst [vmem:[%s152 + $0x8] sm:$0xff] %v155
                %v157 = vld [vmem:[%s151 + $0x20] sm:$0xff]
                %158 = vst [vmem:[%s152 + $0x10] sm:$0xff] %v157
                %v159 = vld [vmem:[%s151 + $0x30] sm:$0xff]
                %160 = vst [vmem:[%s152 + $0x18] sm:$0xff] %v159
                %v161 = vld [vmem:[%s151 + $0x40] sm:$0xff]
                %162 = vst [vmem:[%s152 + $0x20] sm:$0xff] %v161
                %v163 = vld [vmem:[%s151 + $0x50] sm:$0xff]
                %164 = vst [vmem:[%s152 + $0x28] sm:$0xff] %v163
                %v165 = vld [vmem:[%s151 + $0x60] sm:$0xff]
                %166 = vst [vmem:[%s152 + $0x30] sm:$0xff] %v165
                %v167 = vld [vmem:[%s151 + $0x70] sm:$0xff]
                %168 = vst [vmem:[%s152 + $0x38] sm:$0xff] %v167
                %v169 = vld [vmem:[%s151 + $0x80] sm:$0xff]
                %170 = vst [vmem:[%s152 + $0x40] sm:$0xff] %v169
              $region45: #{autoencoder_forward.14} parent=39 // loop_footer
                %s150 = sadd.s32 1, %s146
              $region46: #{autoencoder_forward.14} parent=39 // loop_footer_branch
                %145 = sbr.rel target = $region42
              $region47: #{autoencoder_forward.14} parent=39 // loop_exit
                _
            $region40: #{autoencoder_forward.14} parent=31 // pred_fallthru
              _
          $region32: #{autoencoder_forward.14} parent=27 // pred_fallthru
            _
          %201 = vnop
        $region28: #{autoencoder_forward.14} parent=23 // pred_fallthru
          _
      $region24: #{autoencoder_forward.14} parent=5 // pred_fallthru
        _
      %p202 = scmp.le.s32.totalorder 1, %s9
      %p203 = scmp.lt.s32.totalorder %s9, 3
      %p204 = pnand %p202, %p203
      %p205 = pneg %p204
      // Predicated region
      $region63: #{autoencoder_forward.14} parent=5 // pred_check
        _
      $region64: #{autoencoder_forward.14} parent=5 // pred_check_branch
        %207 = sbr.rel (%p204) target = $region66
      $region65: #{autoencoder_forward.14} parent=5 // pred_region
        %s208 = ssub.s32 %s9, 1
        %s209 = sand.u32 %s22, 1
        %s210 = sand.u32 %s22, 1
        %s211 = smul.addr %s210, 72
        %s212 = scalar_lea.vmem [#allocation2], %s211
        // Predicated region
        $region67: #{autoencoder_forward.14} parent=65 // pred_check
          %p213 = pneg %p35
        $region68: #{autoencoder_forward.14} parent=65 // pred_check_branch
          %215 = sbr.rel (%p213) target = $region70
        $region69: #{autoencoder_forward.14} parent=65 // pred_region
          _
        $region70: #{autoencoder_forward.14} parent=65 // pred_fallthru
          _
        %s216 = sand.u32 %s22, 1
        %s217 = sand.u32 %s22, 1
        %s218 = smul.addr %s217, 72
        %s219 = scalar_lea.vmem [#allocation2], %s218
        %p220 = pneg %p35
        %p221 = pneg %p32
        %p222 = pneg %p56
        %p223 = pneg %p53
        %p224 = pneg %p77
        %p225 = pneg %p74
        %p226 = pneg %p103
        %p227 = pneg %p100
        %s228 = smul.u32 2, %s14
        %p229 = scmp.lt.s32.totalorder %s228, 3
        %s230 = scalar_select %p229, %s228, 3
        %s231 = smul.addr %s230, 4
        %s232 = scalar_lea.vmem %s3, %s231
        %s233 = smul.u32 2, %s14
        %s234 = smul.u32 2, %s14
        %p235 = scmp.lt.s32.totalorder %s234, 3
        %s236 = scalar_select %p235, %s234, 3
        %s237 = smul.addr %s236, 4
        %s238 = scalar_lea.vmem %s3, %s237
        %s239 = smul.u32 2, %s14
        %v241 = vld [vmem:[%s1] sm:$0xf]
        %v242 = vld [vmem:[%s212] sm:$0xff]
        %v243 = vld [vmem:[%s212 + $0x8] sm:$0xff]
        %v244 = vld [vmem:[%s212 + $0x10] sm:$0xff]
        %v245 = vld [vmem:[%s212 + $0x18] sm:$0xff]
        %v246 = vld [vmem:[%s212 + $0x20] sm:$0xff]
        %v247 = vld [vmem:[%s212 + $0x28] sm:$0xff]
        %v248 = vld [vmem:[%s212 + $0x30] sm:$0xff]
        %v249 = vld [vmem:[%s212 + $0x38] sm:$0xff]
        %v250 = vld [vmem:[%s212 + $0x40] sm:$0xff]
        %v251 = vld [vmem:[%s2] sm:$0xff]
        %253 = vset.pattern.permute.xlu0 0
        %254 = vperm.xlu0 %253, %v251
        %v255 = vpop.permute.xlu0 %254
        %v266 = vunpack.c.l.b16 %v242
        %v267 = vunpack.c.h.b16 %v242
        %v268 = vunpack.c.l.b16 %v243
        %v269 = vunpack.c.h.b16 %v243
        %v270 = vunpack.c.l.b16 %v244
        %v271 = vunpack.c.h.b16 %v244
        %v272 = vunpack.c.l.b16 %v245
        %v273 = vunpack.c.h.b16 %v245
        %v274 = vunpack.c.l.b16 %v246
        %v275 = vunpack.c.h.b16 %v246
        %v276 = vunpack.c.l.b16 %v247
        %v277 = vunpack.c.h.b16 %v247
        %v278 = vunpack.c.l.b16 %v248
        %v279 = vunpack.c.h.b16 %v248
        %v280 = vunpack.c.l.b16 %v249
        %v281 = vunpack.c.h.b16 %v249
        %v282 = vunpack.c.l.b16 %v250
        %v283 = vunpack.c.h.b16 %v250
        %v284 = vpack.c.b16 %v268, %v266
        %v285 = vpack.c.b16 %v269, %v267
        %v286 = vpack.c.b16 %v272, %v270
        %v287 = vpack.c.b16 %v273, %v271
        %v288 = vpack.c.b16 %v276, %v274
        %v289 = vpack.c.b16 %v277, %v275
        %v290 = vpack.c.b16 %v280, %v278
        %v291 = vpack.c.b16 %v281, %v279
        %v292 = vpack.c.b16 %v282, %v282
        %v293 = vpack.c.b16 %v283, %v283
        %vm302 = vcmask 588800
        %v304 = vsel %vm302, %v241, 0
        %vm306 = vcmask 1043456
        %v308 = vsel %vm306, %v292, 0
        %v311 = vsel %vm306, %v293, 0
        %313 = vmatprep.subr.bf16.mxu0 %v285
        %314 = vmatpush1.bf16.msra.mxu0 %v284
        %315 = vmatprep.subr.bf16.mxu0 %v287
        %316 = vmatpush1.bf16.msra.mxu0 %v286
        %317 = vmatprep.subr.bf16.mxu0 %v289
        %318 = vmatpush1.bf16.msra.mxu0 %v288
        %319 = vmatprep.subr.bf16.mxu0 %v291
        %320 = vmatpush1.bf16.msra.mxu0 %v290
        %321 = vmatprep.subr.bf16.mxu0 %v311
        %322 = vmatpush1.bf16.msra.mxu0 %v308
        %323 = vmatprep.subr.bf16.mxu0 0
        %324 = vmatpush1.bf16.msra.mxu0 0
        %325 = vmatprep.subr.bf16.mxu0 0
        %326 = vmatpush1.bf16.msra.mxu0 0
        %327 = vmatprep.subr.bf16.mxu0 0
        %328 = vmatpush1.bf16.msra.mxu0 0
        %329 = vmatprep.subr.bf16.mxu0 0
        %330 = vmatpush1.bf16.msra.mxu0 0
        %331 = vmatprep.subr.bf16.mxu0 0
        %332 = vmatpush1.bf16.msra.mxu0 0
        %333 = vmatprep.subr.bf16.mxu0 0
        %334 = vmatpush1.bf16.msra.mxu0 0
        %335 = vmatprep.subr.bf16.mxu0 0
        %336 = vmatpush1.bf16.msra.mxu0 0
        %337 = vmatprep.subr.bf16.mxu0 0
        %338 = vmatpush1.bf16.msra.mxu0 0
        %339 = vmatprep.subr.bf16.mxu0 0
        %340 = vmatpush1.bf16.msra.mxu0 0
        %341 = vmatprep.subr.bf16.mxu0 0
        %342 = vmatpush1.bf16.msra.mxu0 0
        %343 = vmatprep.subr.bf16.mxu0 0
        %344 = vmatpush1.bf16.msra.mxu0 0
        %345 = vmatprep.mubr.bf16.mxu0 0
        %346 = vmatmul.mubr.bf16.gmra.mrb[0].mxu0 %v304
        %v347 = vpop.f32.mrb[0].mxu0
        %v348 = vadd.f32 %v255, %v347
        %v349 = vpop.f32.mrb[0].mxu0
        %v350 = vadd.f32 %v255, %v349
        %v351 = vpop.f32.mrb[0].mxu0
        %v352 = vpop.f32.mrb[0].mxu0
        %353 = vdwg.mxu0
        %v354 = vmax.f32 %v348, 0.0
        %v355 = vmax.f32 %v350, 0.0
        %v356 = vpack.c.bf16 %v354, %v354
        %v357 = vpack.c.bf16 %v355, %v355
        %v360 = vunpack.c.l.b16 %v356
        %v361 = vunpack.c.l.b16 %v357
        %v362 = vpack.c.b16 %v361, %v360
        %364 = vst [vmem:[%s238] sm:$0xff] %v362
        %s365 = smul.u32 2, %s14
        %p366 = scmp.lt.s32.totalorder %s365, 3
        %s367 = scalar_select %p366, %s365, 3
        %s368 = smul.addr %s367, 4
        %s369 = scalar_lea.vmem %s3, %s368
        // Predicated region
        $region71: #{autoencoder_forward.14} parent=65 // pred_check
          %p370 = pneg %p100
        $region72: #{autoencoder_forward.14} parent=65 // pred_check_branch
          %372 = sbr.rel (%p370) target = $region74
        $region73: #{autoencoder_forward.14} parent=65 // pred_region
          %s373 = smul.u32 2, %s14
        $region74: #{autoencoder_forward.14} parent=65 // pred_fallthru
          _
      $region66: #{autoencoder_forward.14} parent=5 // pred_fallthru
        _
      %p374 = scmp.le.s32.totalorder 2, %s9
      // Predicated region
      $region75: #{autoencoder_forward.14} parent=5 // pred_check
        %p375 = pneg %p374
      $region76: #{autoencoder_forward.14} parent=5 // pred_check_branch
        %377 = sbr.rel (%p375) target = $region78
      $region77: #{autoencoder_forward.14} parent=5 // pred_region
        %s378 = ssub.s32 %s9, 2
        // Predicated region
        $region79: #{autoencoder_forward.14} parent=77 // pred_check
          %p379 = pneg %p106
        $region80: #{autoencoder_forward.14} parent=77 // pred_check_branch
          %381 = sbr.rel (%p379) target = $region82
        $region81: #{autoencoder_forward.14} parent=77 // pred_region
          %s382 = smul.u32 2, %s15
          %p383 = scmp.lt.s32.totalorder %s382, 3
          %s384 = scalar_select %p383, %s382, 3
          %s385 = smul.addr %s384, 4
          %s386 = scalar_lea.vmem %s3, %s385
        $region82: #{autoencoder_forward.14} parent=77 // pred_fallthru
          _
      $region78: #{autoencoder_forward.14} parent=5 // pred_fallthru
        _
    $region6: #{autoencoder_forward.14} parent=1 // loop_footer
      %s13 = sadd.s32 1, %s9
    $region7: #{autoencoder_forward.14} parent=1 // loop_footer_branch
      %8 = sbr.rel target = $region3
    $region8: #{autoencoder_forward.14} parent=1 // loop_exit
      _

// kernel: autoencoder_forward.15
$region0: #{autoencoder_forward.15}
  #allocation0 [shape = 'u32[]', space=smem, size = 0x4, offset = 0x4, fixed_abs, tag = 'smem constant byte address 0x4 - core index']
  #allocation1 [shape = 'u32[144,128]{1,0:T(1,128)}', space=vmem, size = 0x12000, scoped, tag = 'internal scratch']
  %s0 = inlined_call_operand.vmem [shape: bf16[72,512], index: 0, kind: input, shape index: {}]
  %s1 = inlined_call_operand.vmem [shape: bf16[4,72], index: 1, kind: input, shape index: {}]
  %s2 = inlined_call_operand.vmem [shape: f32[4,1], index: 2, kind: input, shape index: {}]
  %s3 = inlined_call_operand.vmem [shape: f32[4,1], index: 3, kind: input, shape index: {}]
  %s4 = inlined_call_operand.vmem [shape: bf16[4,512], index: 4, kind: input, shape index: {}]
  %s5 = inlined_call_operand.vmem [shape: bf16[4,512], index: 5, kind: output, shape index: {}]
  %s6 = sld [smem:[#allocation0]]
  $region91: #{autoencoder_forward.15} parent=0
    _
  %s8 = ssub.s32 1, %s6
  %s9 = scalar_select 0, %s8, %s6
  $region1: #{autoencoder_forward.15} parent=0
    #allocation2 [shape = 'u8[73728]{0}', space=vmem, size = 0x12000, scoped, tag = 'input window, operand 0']
    loop: start=0, step=1, limit=4
    $region2: #{autoencoder_forward.15} parent=1 // loop_pre_header
      _
    $region3: #{autoencoder_forward.15} parent=1 // loop_header
      %s11 = sphi 0, %s15
      %p12 = scmp.ge.s32.totalorder %s11, 4
      %s21 = sphi 0, %s23
      %s24 = sphi 0, %s21
      %s25 = sphi 0, %s24
      %s41 = sphi 0, %s25
      %s45 = sphi 0, %s45
      %s47 = sphi 0, %s45
      %s48 = sphi 0, %s47
      %s62 = sphi 0, %s48
      %s66 = sphi 0, %s66
      %s68 = sphi 0, %s66
      %s69 = sphi 0, %s68
      %s83 = sphi 0, %s69
      %s87 = sphi 0, %s87
      %s89 = sphi 0, %s87
      %s90 = sphi 0, %s89
      %s104 = sphi 0, %s90
      %s110 = sphi 0, %s112
      %s113 = sphi 0, %s110
      %s114 = sphi 0, %s113
      %s130 = sphi 0, %s114
      %s136 = sphi 0, %s138
      %s139 = sphi 0, %s136
      %s140 = sphi 0, %s139
      %s156 = sphi 0, %s140
    $region4: #{autoencoder_forward.15} parent=1 // loop_header_branch
      %14 = sbr.rel (%p12) target = $region8
    $region5: #{autoencoder_forward.15} parent=1 // loop_body
      %s16 = ssub.s32 %s11, 1
      %s17 = ssub.s32 %s11, 2
      %s18 = sadd.s32 %s11, 1
      %s19 = ssub.s32 %s11, %s18
      %p20 = scmp.eq.s32.totalorder %s19, 0
      %s22 = sadd.s32 %s21, 1
      %s23 = scalar_select %p20, %s21, %s22
      %p26 = pneg %p20
      %p27 = scmp.eq.s32.totalorder %s11, 1
      %p28 = por %p26, %p27
      %p29 = scmp.ne.s32.totalorder %s21, %s24
      %p30 = scmp.eq.s32.totalorder %s11, 0
      %p31 = por %p29, %p30
      %p32 = scmp.ne.s32.totalorder %s21, %s24
      %p33 = scmp.eq.s32.totalorder %s16, 1
      %p34 = por %p32, %p33
      %p35 = scmp.ne.s32.totalorder %s24, %s25
      %p36 = scmp.eq.s32.totalorder %s16, 0
      %p37 = por %p35, %p36
      %p38 = scmp.ne.s32.totalorder %s24, %s25
      %p39 = scmp.eq.s32.totalorder %s17, 1
      %p40 = por %p38, %p39
      %p42 = scmp.ne.s32.totalorder %s25, %s41
      %p43 = scmp.eq.s32.totalorder %s17, 0
      %p44 = por %p42, %p43
      %s46 = sadd.s32 %s45, 1
      %p49 = scmp.eq.s32.totalorder %s11, 1
      %p50 = scmp.ne.s32.totalorder %s45, %s47
      %p51 = scmp.eq.s32.totalorder %s11, 0
      %p52 = por %p50, %p51
      %p53 = scmp.ne.s32.totalorder %s45, %s47
      %p54 = scmp.eq.s32.totalorder %s16, 1
      %p55 = por %p53, %p54
      %p56 = scmp.ne.s32.totalorder %s47, %s48
      %p57 = scmp.eq.s32.totalorder %s16, 0
      %p58 = por %p56, %p57
      %p59 = scmp.ne.s32.totalorder %s47, %s48
      %p60 = scmp.eq.s32.totalorder %s17, 1
      %p61 = por %p59, %p60
      %p63 = scmp.ne.s32.totalorder %s48, %s62
      %p64 = scmp.eq.s32.totalorder %s17, 0
      %p65 = por %p63, %p64
      %s67 = sadd.s32 %s66, 1
      %p70 = scmp.eq.s32.totalorder %s11, 1
      %p71 = scmp.ne.s32.totalorder %s66, %s68
      %p72 = scmp.eq.s32.totalorder %s11, 0
      %p73 = por %p71, %p72
      %p74 = scmp.ne.s32.totalorder %s66, %s68
      %p75 = scmp.eq.s32.totalorder %s16, 1
      %p76 = por %p74, %p75
      %p77 = scmp.ne.s32.totalorder %s68, %s69
      %p78 = scmp.eq.s32.totalorder %s16, 0
      %p79 = por %p77, %p78
      %p80 = scmp.ne.s32.totalorder %s68, %s69
      %p81 = scmp.eq.s32.totalorder %s17, 1
      %p82 = por %p80, %p81
      %p84 = scmp.ne.s32.totalorder %s69, %s83
      %p85 = scmp.eq.s32.totalorder %s17, 0
      %p86 = por %p84, %p85
      %s88 = sadd.s32 %s87, 1
      %p91 = scmp.eq.s32.totalorder %s11, 1
      %p92 = scmp.ne.s32.totalorder %s87, %s89
      %p93 = scmp.eq.s32.totalorder %s11, 0
      %p94 = por %p92, %p93
      %p95 = scmp.ne.s32.totalorder %s87, %s89
      %p96 = scmp.eq.s32.totalorder %s16, 1
      %p97 = por %p95, %p96
      %p98 = scmp.ne.s32.totalorder %s89, %s90
      %p99 = scmp.eq.s32.totalorder %s16, 0
      %p100 = por %p98, %p99
      %p101 = scmp.ne.s32.totalorder %s89, %s90
      %p102 = scmp.eq.s32.totalorder %s17, 1
      %p103 = por %p101, %p102
      %p105 = scmp.ne.s32.totalorder %s90, %s104
      %p106 = scmp.eq.s32.totalorder %s17, 0
      %p107 = por %p105, %p106
      %s108 = ssub.s32 %s11, %s18
      %p109 = scmp.eq.s32.totalorder %s108, 0
      %s111 = sadd.s32 %s110, 1
      %s112 = scalar_select %p109, %s110, %s111
      %p115 = pneg %p109
      %p116 = scmp.eq.s32.totalorder %s11, 1
      %p117 = por %p115, %p116
      %p118 = scmp.ne.s32.totalorder %s110, %s113
      %p119 = scmp.eq.s32.totalorder %s11, 0
      %p120 = por %p118, %p119
      %p121 = scmp.ne.s32.totalorder %s110, %s113
      %p122 = scmp.eq.s32.totalorder %s16, 1
      %p123 = por %p121, %p122
      %p124 = scmp.ne.s32.totalorder %s113, %s114
      %p125 = scmp.eq.s32.totalorder %s16, 0
      %p126 = por %p124, %p125
      %p127 = scmp.ne.s32.totalorder %s113, %s114
      %p128 = scmp.eq.s32.totalorder %s17, 1
      %p129 = por %p127, %p128
      %p131 = scmp.ne.s32.totalorder %s114, %s130
      %p132 = scmp.eq.s32.totalorder %s17, 0
      %p133 = por %p131, %p132
      %s134 = ssub.s32 %s11, %s18
      %p135 = scmp.eq.s32.totalorder %s134, 0
      %s137 = sadd.s32 %s136, 1
      %s138 = scalar_select %p135, %s136, %s137
      %p141 = pneg %p135
      %p142 = scmp.eq.s32.totalorder %s11, 1
      %p143 = por %p141, %p142
      %p144 = scmp.ne.s32.totalorder %s136, %s139
      %p145 = scmp.eq.s32.totalorder %s11, 0
      %p146 = por %p144, %p145
      %p147 = scmp.ne.s32.totalorder %s136, %s139
      %p148 = scmp.eq.s32.totalorder %s16, 1
      %p149 = por %p147, %p148
      %p150 = scmp.ne.s32.totalorder %s139, %s140
      %p151 = scmp.eq.s32.totalorder %s16, 0
      %p152 = por %p150, %p151
      %p153 = scmp.ne.s32.totalorder %s139, %s140
      %p154 = scmp.eq.s32.totalorder %s17, 1
      %p155 = por %p153, %p154
      %p157 = scmp.ne.s32.totalorder %s140, %s156
      %p158 = scmp.eq.s32.totalorder %s17, 0
      %p159 = por %p157, %p158
      %p160 = scmp.le.s32.totalorder 1, %s11
      %p161 = scmp.lt.s32.totalorder %s11, 3
      %p162 = pnand %p160, %p161
      %p163 = pneg %p162
      // Predicated region
      $region9: #{autoencoder_forward.15} parent=5 // pred_check
        _
      $region10: #{autoencoder_forward.15} parent=5 // pred_check_branch
        %165 = sbr.rel (%p162) target = $region12
      $region11: #{autoencoder_forward.15} parent=5 // pred_region
        %s166 = ssub.s32 %s11, 1
        // Predicated region
        $region13: #{autoencoder_forward.15} parent=11 // pred_check
          %p167 = pneg %p58
        $region14: #{autoencoder_forward.15} parent=11 // pred_check_branch
          %169 = sbr.rel (%p167) target = $region16
        $region15: #{autoencoder_forward.15} parent=11 // pred_region
          _
        $region16: #{autoencoder_forward.15} parent=11 // pred_fallthru
          _
        // Predicated region
        $region17: #{autoencoder_forward.15} parent=11 // pred_check
          %p170 = pneg %p79
        $region18: #{autoencoder_forward.15} parent=11 // pred_check_branch
          %172 = sbr.rel (%p170) target = $region20
        $region19: #{autoencoder_forward.15} parent=11 // pred_region
          _
        $region20: #{autoencoder_forward.15} parent=11 // pred_fallthru
          _
        // Predicated region
        $region21: #{autoencoder_forward.15} parent=11 // pred_check
          %p173 = pneg %p100
        $region22: #{autoencoder_forward.15} parent=11 // pred_check_branch
          %175 = sbr.rel (%p173) target = $region24
        $region23: #{autoencoder_forward.15} parent=11 // pred_region
          _
        $region24: #{autoencoder_forward.15} parent=11 // pred_fallthru
          _
      $region12: #{autoencoder_forward.15} parent=5 // pred_fallthru
        _
      %p176 = scmp.lt.s32.totalorder %s11, 2
      // Predicated region
      $region25: #{autoencoder_forward.15} parent=5 // pred_check
        %p177 = pneg %p176
      $region26: #{autoencoder_forward.15} parent=5 // pred_check_branch
        %179 = sbr.rel (%p177) target = $region28
      $region27: #{autoencoder_forward.15} parent=5 // pred_region
        // Predicated region
        $region29: #{autoencoder_forward.15} parent=27 // pred_check
          %p180 = pneg %p31
        $region30: #{autoencoder_forward.15} parent=27 // pred_check_branch
          %182 = sbr.rel (%p180) target = $region32
        $region31: #{autoencoder_forward.15} parent=27 // pred_region
          %s183 = sand.u32 %s21, 1
          %s184 = sand.u32 %s21, 1
          %s185 = smul.addr %s184, 72
          %s186 = scalar_lea.vmem [#allocation2], %s185
          %s187 = smul.u32 2, %s11
          %s188 = smul.addr %s187, 4
          %s189 = scalar_lea.vmem %s0, %s188
          // Predicated region
          $region33: #{autoencoder_forward.15} parent=31 // pred_check
            _
          $region34: #{autoencoder_forward.15} parent=31 // pred_check_branch
            %191 = sbr.rel (0) target = $region36
          $region35: #{autoencoder_forward.15} parent=31 // pred_region
            // Predicated region
            $region37: #{autoencoder_forward.15} parent=35 // pred_check
              _
            $region38: #{autoencoder_forward.15} parent=35 // pred_check_branch
              %193 = sbr.rel (0) target = $region40
            $region39: #{autoencoder_forward.15} parent=35 // pred_region
              // Predicated region
              $region52: #{autoencoder_forward.15} parent=39 // pred_check
                _
              $region53: #{autoencoder_forward.15} parent=39 // pred_check_branch
                %224 = sbr.rel (0) target = $region55
              $region54: #{autoencoder_forward.15} parent=39 // pred_region
                loop: start=0, step=1, limit=1
                $region56: #{autoencoder_forward.15} parent=54 // loop_pre_header
                  _
                $region57: #{autoencoder_forward.15} parent=54 // loop_header
                  %s226 = sphi 0, %s230
                  %p227 = scmp.ge.s32.totalorder %s226, 1
                  %s231 = sphi %s189, %s189
                  %s232 = sphi %s186, %s186
                $region58: #{autoencoder_forward.15} parent=54 // loop_header_branch
                  %229 = sbr.rel (%p227) target = $region62
                $region59: #{autoencoder_forward.15} parent=54 // loop_body
                  %v233 = vld [vmem:[%s231] sm:$0xff]
                  %234 = vst [vmem:[%s232] sm:$0xff] %v233
                  %v235 = vld [vmem:[%s231 + $0x10] sm:$0xff]
                  %236 = vst [vmem:[%s232 + $0x8] sm:$0xff] %v235
                  %v237 = vld [vmem:[%s231 + $0x20] sm:$0xff]
                  %238 = vst [vmem:[%s232 + $0x10] sm:$0xff] %v237
                  %v239 = vld [vmem:[%s231 + $0x30] sm:$0xff]
                  %240 = vst [vmem:[%s232 + $0x18] sm:$0xff] %v239
                  %v241 = vld [vmem:[%s231 + $0x40] sm:$0xff]
                  %242 = vst [vmem:[%s232 + $0x20] sm:$0xff] %v241
                  %v243 = vld [vmem:[%s231 + $0x50] sm:$0xff]
                  %244 = vst [vmem:[%s232 + $0x28] sm:$0xff] %v243
                  %v245 = vld [vmem:[%s231 + $0x60] sm:$0xff]
                  %246 = vst [vmem:[%s232 + $0x30] sm:$0xff] %v245
                  %v247 = vld [vmem:[%s231 + $0x70] sm:$0xff]
                  %248 = vst [vmem:[%s232 + $0x38] sm:$0xff] %v247
                  %v249 = vld [vmem:[%s231 + $0x80] sm:$0xff]
                  %250 = vst [vmem:[%s232 + $0x40] sm:$0xff] %v249
                $region60: #{autoencoder_forward.15} parent=54 // loop_footer
                  %s230 = sadd.s32 1, %s226
                $region61: #{autoencoder_forward.15} parent=54 // loop_footer_branch
                  %225 = sbr.rel target = $region57
                $region62: #{autoencoder_forward.15} parent=54 // loop_exit
                  _
              $region55: #{autoencoder_forward.15} parent=39 // pred_fallthru
                _
              // Predicated region
              $region63: #{autoencoder_forward.15} parent=39 // pred_check
                _
              $region64: #{autoencoder_forward.15} parent=39 // pred_check_branch
                %252 = sbr.rel target = $region66
              $region65: #{autoencoder_forward.15} parent=39 // pred_region
                _
              $region66: #{autoencoder_forward.15} parent=39 // pred_fallthru
                _
            $region40: #{autoencoder_forward.15} parent=35 // pred_fallthru
              _
            // Predicated region
            $region41: #{autoencoder_forward.15} parent=35 // pred_check
              _
            $region42: #{autoencoder_forward.15} parent=35 // pred_check_branch
              %195 = sbr.rel target = $region44
            $region43: #{autoencoder_forward.15} parent=35 // pred_region
              loop: start=0, step=1, limit=1
              $region45: #{autoencoder_forward.15} parent=43 // loop_pre_header
                _
              $region46: #{autoencoder_forward.15} parent=43 // loop_header
                %s198 = sphi 0, %s202
                %p199 = scmp.ge.s32.totalorder %s198, 1
                %s203 = sphi %s189, %s189
                %s204 = sphi %s186, %s186
              $region47: #{autoencoder_forward.15} parent=43 // loop_header_branch
                %201 = sbr.rel (%p199) target = $region51
              $region48: #{autoencoder_forward.15} parent=43 // loop_body
                %v205 = vld [vmem:[%s203] sm:$0xff]
                %206 = vst [vmem:[%s204] sm:$0xff] %v205
                %v207 = vld [vmem:[%s203 + $0x10] sm:$0xff]
                %208 = vst [vmem:[%s204 + $0x8] sm:$0xff] %v207
                %v209 = vld [vmem:[%s203 + $0x20] sm:$0xff]
                %210 = vst [vmem:[%s204 + $0x10] sm:$0xff] %v209
                %v211 = vld [vmem:[%s203 + $0x30] sm:$0xff]
                %212 = vst [vmem:[%s204 + $0x18] sm:$0xff] %v211
                %v213 = vld [vmem:[%s203 + $0x40] sm:$0xff]
                %214 = vst [vmem:[%s204 + $0x20] sm:$0xff] %v213
                %v215 = vld [vmem:[%s203 + $0x50] sm:$0xff]
                %216 = vst [vmem:[%s204 + $0x28] sm:$0xff] %v215
                %v217 = vld [vmem:[%s203 + $0x60] sm:$0xff]
                %218 = vst [vmem:[%s204 + $0x30] sm:$0xff] %v217
                %v219 = vld [vmem:[%s203 + $0x70] sm:$0xff]
                %220 = vst [vmem:[%s204 + $0x38] sm:$0xff] %v219
                %v221 = vld [vmem:[%s203 + $0x80] sm:$0xff]
                %222 = vst [vmem:[%s204 + $0x40] sm:$0xff] %v221
              $region49: #{autoencoder_forward.15} parent=43 // loop_footer
                %s202 = sadd.s32 1, %s198
              $region50: #{autoencoder_forward.15} parent=43 // loop_footer_branch
                %197 = sbr.rel target = $region46
              $region51: #{autoencoder_forward.15} parent=43 // loop_exit
                _
            $region44: #{autoencoder_forward.15} parent=35 // pred_fallthru
              _
          $region36: #{autoencoder_forward.15} parent=31 // pred_fallthru
            _
          %253 = vnop
        $region32: #{autoencoder_forward.15} parent=27 // pred_fallthru
          _
        // Predicated region
        $region67: #{autoencoder_forward.15} parent=27 // pred_check
          %p254 = pneg %p120
        $region68: #{autoencoder_forward.15} parent=27 // pred_check_branch
          %256 = sbr.rel (%p254) target = $region70
        $region69: #{autoencoder_forward.15} parent=27 // pred_region
          %s257 = smul.u32 2, %s11
          %p258 = scmp.lt.s32.totalorder %s257, 3
          %s259 = scalar_select %p258, %s257, 3
          %s260 = smul.addr %s259, 2
          %s261 = scalar_lea.vmem %s4, %s260
          %s262 = smul.u32 2, %s11
        $region70: #{autoencoder_forward.15} parent=27 // pred_fallthru
          _
      $region28: #{autoencoder_forward.15} parent=5 // pred_fallthru
        _
      %p263 = scmp.le.s32.totalorder 1, %s11
      %p264 = scmp.lt.s32.totalorder %s11, 3
      %p265 = pnand %p263, %p264
      %p266 = pneg %p265
      // Predicated region
      $region71: #{autoencoder_forward.15} parent=5 // pred_check
        _
      $region72: #{autoencoder_forward.15} parent=5 // pred_check_branch
        %268 = sbr.rel (%p265) target = $region74
      $region73: #{autoencoder_forward.15} parent=5 // pred_region
        %s269 = ssub.s32 %s11, 1
        %s270 = sand.u32 %s24, 1
        %s271 = sand.u32 %s24, 1
        %s272 = smul.addr %s271, 72
        %s273 = scalar_lea.vmem [#allocation2], %s272
        // Predicated region
        $region75: #{autoencoder_forward.15} parent=73 // pred_check
          %p274 = pneg %p37
        $region76: #{autoencoder_forward.15} parent=73 // pred_check_branch
          %276 = sbr.rel (%p274) target = $region78
        $region77: #{autoencoder_forward.15} parent=73 // pred_region
          _
        $region78: #{autoencoder_forward.15} parent=73 // pred_fallthru
          _
        %s277 = sand.u32 %s24, 1
        %s278 = sand.u32 %s24, 1
        %s279 = smul.addr %s278, 72
        %s280 = scalar_lea.vmem [#allocation2], %s279
        %p281 = pneg %p37
        %p282 = pneg %p34
        %p283 = pneg %p58
        %p284 = pneg %p55
        %p285 = pneg %p79
        %p286 = pneg %p76
        %p287 = pneg %p100
        %p288 = pneg %p97
        %s289 = smul.u32 2, %s16
        %p290 = scmp.lt.s32.totalorder %s289, 3
        %s291 = scalar_select %p290, %s289, 3
        %s292 = smul.addr %s291, 2
        %s293 = scalar_lea.vmem %s4, %s292
        %p294 = pneg %p126
        %p295 = pneg %p123
        %p296 = pneg %p152
        %p297 = pneg %p149
        %s298 = smul.u32 2, %s16
        %p299 = scmp.lt.s32.totalorder %s298, 3
        %s300 = scalar_select %p299, %s298, 3
        %s301 = smul.addr %s300, 2
        %s302 = scalar_lea.vmem %s5, %s301
        %s303 = smul.u32 2, %s16
        %s304 = smul.u32 2, %s16
        %p305 = scmp.lt.s32.totalorder %s304, 3
        %s306 = scalar_select %p305, %s304, 3
        %s307 = smul.addr %s306, 2
        %s308 = scalar_lea.vmem %s4, %s307
        %s309 = smul.u32 2, %s16
        %s310 = smul.u32 2, %s16
        %p311 = scmp.lt.s32.totalorder %s310, 3
        %s312 = scalar_select %p311, %s310, 3
        %s313 = smul.addr %s312, 2
        %s314 = scalar_lea.vmem %s5, %s313
        %s315 = smul.u32 2, %s16
        %v317 = vld [vmem:[%s1] sm:$0x3]
        %v318 = vld [vmem:[%s273] sm:$0xff]
        %v319 = vld [vmem:[%s273 + $0x8] sm:$0xff]
        %v320 = vld [vmem:[%s273 + $0x10] sm:$0xff]
        %v321 = vld [vmem:[%s273 + $0x18] sm:$0xff]
        %v322 = vld [vmem:[%s273 + $0x20] sm:$0xff]
        %v323 = vld [vmem:[%s273 + $0x28] sm:$0xff]
        %v324 = vld [vmem:[%s273 + $0x30] sm:$0xff]
        %v325 = vld [vmem:[%s273 + $0x38] sm:$0xff]
        %v326 = vld [vmem:[%s273 + $0x40] sm:$0xff]
        %v327 = vld [vmem:[%s2] sm:$0xf]
        %329 = vset.pattern.permute.xlu0 0
        %330 = vperm.xlu0 %329, %v327
        %v331 = vpop.permute.xlu0 %330
        %v342 = vunpack.c.l.b16 %v318
        %v343 = vunpack.c.h.b16 %v318
        %v344 = vunpack.c.l.b16 %v319
        %v345 = vunpack.c.h.b16 %v319
        %v346 = vunpack.c.l.b16 %v320
        %v347 = vunpack.c.h.b16 %v320
        %v348 = vunpack.c.l.b16 %v321
        %v349 = vunpack.c.h.b16 %v321
        %v350 = vunpack.c.l.b16 %v322
        %v351 = vunpack.c.h.b16 %v322
        %v352 = vunpack.c.l.b16 %v323
        %v353 = vunpack.c.h.b16 %v323
        %v354 = vunpack.c.l.b16 %v324
        %v355 = vunpack.c.h.b16 %v324
        %v356 = vunpack.c.l.b16 %v325
        %v357 = vunpack.c.h.b16 %v325
        %v358 = vunpack.c.l.b16 %v326
        %v359 = vunpack.c.h.b16 %v326
        %v360 = vpack.c.b16 %v344, %v342
        %v361 = vpack.c.b16 %v345, %v343
        %v362 = vpack.c.b16 %v348, %v346
        %v363 = vpack.c.b16 %v349, %v347
        %v364 = vpack.c.b16 %v352, %v350
        %v365 = vpack.c.b16 %v353, %v351
        %v366 = vpack.c.b16 %v356, %v354
        %v367 = vpack.c.b16 %v357, %v355
        %v368 = vpack.c.b16 %v358, %v358
        %v369 = vpack.c.b16 %v359, %v359
        %vm378 = vcmask 588800
        %v380 = vsel %vm378, %v317, 0
        %vm382 = vcmask 1043456
        %v384 = vsel %vm382, %v368, 0
        %v387 = vsel %vm382, %v369, 0
        %389 = vmatprep.subr.bf16.mxu0 %v361
        %390 = vmatpush1.bf16.msra.mxu0 %v360
        %391 = vmatprep.subr.bf16.mxu0 %v363
        %392 = vmatpush1.bf16.msra.mxu0 %v362
        %393 = vmatprep.subr.bf16.mxu0 %v365
        %394 = vmatpush1.bf16.msra.mxu0 %v364
        %395 = vmatprep.subr.bf16.mxu0 %v367
        %396 = vmatpush1.bf16.msra.mxu0 %v366
        %397 = vmatprep.subr.bf16.mxu0 %v387
        %398 = vmatpush1.bf16.msra.mxu0 %v384
        %399 = vmatprep.subr.bf16.mxu0 0
        %400 = vmatpush1.bf16.msra.mxu0 0
        %401 = vmatprep.subr.bf16.mxu0 0
        %402 = vmatpush1.bf16.msra.mxu0 0
        %403 = vmatprep.subr.bf16.mxu0 0
        %404 = vmatpush1.bf16.msra.mxu0 0
        %405 = vmatprep.subr.bf16.mxu0 0
        %406 = vmatpush1.bf16.msra.mxu0 0
        %407 = vmatprep.subr.bf16.mxu0 0
        %408 = vmatpush1.bf16.msra.mxu0 0
        %409 = vmatprep.subr.bf16.mxu0 0
        %410 = vmatpush1.bf16.msra.mxu0 0
        %411 = vmatprep.subr.bf16.mxu0 0
        %412 = vmatpush1.bf16.msra.mxu0 0
        %413 = vmatprep.subr.bf16.mxu0 0
        %414 = vmatpush1.bf16.msra.mxu0 0
        %415 = vmatprep.subr.bf16.mxu0 0
        %416 = vmatpush1.bf16.msra.mxu0 0
        %417 = vmatprep.subr.bf16.mxu0 0
        %418 = vmatpush1.bf16.msra.mxu0 0
        %419 = vmatprep.subr.bf16.mxu0 0
        %420 = vmatpush1.bf16.msra.mxu0 0
        %421 = vmatprep.mubr.bf16.mxu0 0
        %422 = vmatmul.mubr.bf16.gmra.mrb[0].mxu0 %v380
        %v423 = vpop.f32.mrb[0].mxu0
        %v424 = vadd.f32 %v331, %v423
        %v425 = vpop.f32.mrb[0].mxu0
        %v426 = vadd.f32 %v331, %v425
        %v427 = vpop.f32.mrb[0].mxu0
        %v428 = vpop.f32.mrb[0].mxu0
        %429 = vdwg.mxu0
        %v430 = vld [vmem:[%s3] sm:$0xf]
        %v431 = vld [vmem:[%s308] sm:$0xf]
        %v432 = vunpack.c.l.bf16 %v431
        %434 = vset.pattern.permute.xlu0 0
        %435 = vperm.xlu0 %434, %v430
        %v436 = vpop.permute.xlu0 %435
        %v439 = vcombine.high %v432, %v432
        %v441 = vmul.f32 %v436, %v432
        %v442 = vmul.f32 %v436, %v439
        %v443 = vadd.f32 %v424, %v441
        %v444 = vadd.f32 %v426, %v442
        %v445 = vsub.f32 0.0, %v443
        %v446 = vsub.f32 0.0, %v444
        %v447 = vmul.f32 %v445, 1.442695
        %v448 = vpow.pop %v447
        %v449 = vmul.f32 %v446, 1.442695
        %v450 = vpow.pop %v449
        %v451 = vadd.f32 %v448, 1.0
        %v452 = vadd.f32 %v450, 1.0
        %v453 = vrcp.pop %v451
        %v454 = vmul.f32 1.0, %v453
        %v455 = vrcp.pop %v452
        %v456 = vmul.f32 1.0, %v455
        %v457 = vpack.c.bf16 %v454, %v454
        %v458 = vpack.c.bf16 %v456, %v456
        %v461 = vcombine.low %v457, %v458
        %v463 = vunpack.c.l.s4 1983009808
        %v464 = vunpack.c.0.s8 %v463
        %v465 = vlaneseq
        %v466 = vshrl.u32 %v465, 7
        %v467 = vsub.s32 %v464, %v466
        %v468 = vrot.slane %v461, %v467
        %470 = vst [vmem:[%s314] sm:$0xf] %v468
        %s471 = smul.u32 2, %s16
        %p472 = scmp.lt.s32.totalorder %s471, 3
        %s473 = scalar_select %p472, %s471, 3
        %s474 = smul.addr %s473, 2
        %s475 = scalar_lea.vmem %s5, %s474
        // Predicated region
        $region79: #{autoencoder_forward.15} parent=73 // pred_check
          %p476 = pneg %p149
        $region80: #{autoencoder_forward.15} parent=73 // pred_check_branch
          %478 = sbr.rel (%p476) target = $region82
        $region81: #{autoencoder_forward.15} parent=73 // pred_region
          %s479 = smul.u32 2, %s16
        $region82: #{autoencoder_forward.15} parent=73 // pred_fallthru
          _
      $region74: #{autoencoder_forward.15} parent=5 // pred_fallthru
        _
      %p480 = scmp.le.s32.totalorder 2, %s11
      // Predicated region
      $region83: #{autoencoder_forward.15} parent=5 // pred_check
        %p481 = pneg %p480
      $region84: #{autoencoder_forward.15} parent=5 // pred_check_branch
        %483 = sbr.rel (%p481) target = $region86
      $region85: #{autoencoder_forward.15} parent=5 // pred_region
        %s484 = ssub.s32 %s11, 2
        // Predicated region
        $region87: #{autoencoder_forward.15} parent=85 // pred_check
          %p485 = pneg %p155
        $region88: #{autoencoder_forward.15} parent=85 // pred_check_branch
          %487 = sbr.rel (%p485) target = $region90
        $region89: #{autoencoder_forward.15} parent=85 // pred_region
          %s488 = smul.u32 2, %s17
          %p489 = scmp.lt.s32.totalorder %s488, 3
          %s490 = scalar_select %p489, %s488, 3
          %s491 = smul.addr %s490, 2
          %s492 = scalar_lea.vmem %s5, %s491
        $region90: #{autoencoder_forward.15} parent=85 // pred_fallthru
          _
      $region86: #{autoencoder_forward.15} parent=5 // pred_fallthru
        _
    $region6: #{autoencoder_forward.15} parent=1 // loop_footer
      %s15 = sadd.s32 1, %s11
    $region7: #{autoencoder_forward.15} parent=1 // loop_footer_branch
      %10 = sbr.rel target = $region3
    $region8: #{autoencoder_forward.15} parent=1 // loop_exit
      _

</llo_original>
